<compile_context>
chip_gen: v6e
topology: v6e:2x2x1
jax: 0.10.0
libtpu: 0.0.40
codegen_flags: <defaults>
</compile_context>

<pallas_src>
import functools
import math

import jax
import jax.numpy as jnp
from jax.experimental import pallas as pl
from jax.experimental.pallas import tpu as pltpu

CIN = 64
COUT = 64
K = 3  # cubic kernel, stride 1, padding 1


def _round_up(x, m):
    return (x + m - 1) // m * m


def conv3d_relu_kernel(x0_ref, x1_ref, x2_ref, w_ref, o_ref, *, H, W, Wp):
    # x*_ref: (Hp*Wp, CIN) bf16 -- padded depth slices d, d+1, d+2 (rows h-major)
    # w_ref:  (K, K, CIN, K*COUT) bf16 -- kw taps fused along the output dim
    # o_ref:  (H, W, COUT) f32 -- output slab for depth slice d
    M = H * Wp
    C = COUT
    xs = (x0_ref, x1_ref, x2_ref)

    acc = jnp.zeros((M, K * C), dtype=jnp.float32)
    for kd in range(K):          # 9 taps: static unroll, one wide dot each
        for kh in range(K):
            rows = xs[kd][kh * Wp: kh * Wp + M, :]           # (M, CIN), aligned
            acc = acc + jnp.dot(rows, w_ref[kd, kh],
                                preferred_element_type=jnp.float32)

    # single kw shift-combine per depth slice
    a0 = acc[:, 0 * C:1 * C].reshape(H, Wp, C)
    a1 = acc[:, 1 * C:2 * C].reshape(H, Wp, C)
    a2 = acc[:, 2 * C:3 * C].reshape(H, Wp, C)
    out = a0[:, 0:W, :] + a1[:, 1:W + 1, :] + a2[:, 2:W + 2, :]
    o_ref[...] = jnp.maximum(out, 0.0).astype(o_ref.dtype)


def conv_relu_block(x_ncdhw, weight_oidhw):
    """Forward pass of Conv_ReLU_Block.

    x_ncdhw:      (N, 64, D, H, W) float32 (PyTorch NCDHW)
    weight_oidhw: (64, 64, 3, 3, 3) float32 (PyTorch Conv3d weight)
    returns:      (N, 64, D, H, W) float32
    """
    N, C, D, H, W = x_ncdhw.shape
    assert C == CIN

    Wp = _round_up(W + 2, 8)     # padded width, 8-aligned (extra cols unused)
    Hp = H + 2
    Dp = D + 2

    # --- glue (plain JAX): channels-last, bf16, halo pad, flatten (H, W) ---
    x = jnp.transpose(x_ncdhw, (0, 2, 3, 4, 1)).astype(jnp.bfloat16)  # NDHWC
    x = jnp.pad(x, ((0, 0), (1, 1), (1, 1), (1, Wp - W - 1), (0, 0)))
    x = x.reshape(N, Dp, Hp * Wp, CIN)

    # weights: (Cout,Cin,kD,kH,kW) -> (kD,kH,Cin, kW*Cout), bf16
    w = jnp.transpose(weight_oidhw, (2, 3, 1, 4, 0)).reshape(K, K, CIN, K * COUT)
    w = w.astype(jnp.bfloat16)

    kernel = functools.partial(conv3d_relu_kernel, H=H, W=W, Wp=Wp)

    out_ndhwc = pl.pallas_call(
        kernel,
        out_shape=jax.ShapeDtypeStruct((N, D, H, W, COUT), jnp.float32),
        grid_spec=pltpu.PrefetchScalarGridSpec(
            num_scalar_prefetch=0,
            grid=(N, D),
            in_specs=[
                pl.BlockSpec((None, None, Hp * Wp, CIN), lambda n, d: (n, d, 0, 0)),
                pl.BlockSpec((None, None, Hp * Wp, CIN), lambda n, d: (n, d + 1, 0, 0)),
                pl.BlockSpec((None, None, Hp * Wp, CIN), lambda n, d: (n, d + 2, 0, 0)),
                pl.BlockSpec((K, K, CIN, K * COUT), lambda n, d: (0, 0, 0, 0)),
            ],
            out_specs=pl.BlockSpec((None, None, H, W, COUT),
                                   lambda n, d: (n, d, 0, 0, 0)),
        ),
        compiler_params=pltpu.CompilerParams(
            dimension_semantics=("parallel", "parallel"),
            vmem_limit_bytes=48 * 1024 * 1024,
        ),
    )(x, x, x, w)

    return jnp.transpose(out_ndhwc, (0, 4, 1, 2, 3))  # back to NCDHW


def _reference(x_ncdhw, weight_oidhw):
    return jax.nn.relu(
        jax.lax.conv_general_dilated(
            x_ncdhw, weight_oidhw,
            window_strides=(1, 1, 1),
            padding=((1, 1), (1, 1), (1, 1)),
            dimension_numbers=("NCDHW", "OIDHW", "NCDHW"),
        )
    )


if __name__ == "__main__":
    key = jax.random.PRNGKey(0)
    kx, kw = jax.random.split(key)

    # small shapes consistent with the module (channels fixed at 64 by Conv3d)
    N, D, H, W = 2, 4, 8, 8
    x = jax.random.normal(kx, (N, CIN, D, H, W), dtype=jnp.float32)

    # deterministic VDSR-style init: N(0, sqrt(2 / (k^3 * out_channels)))
    std = math.sqrt(2.0 / (K * K * K * COUT))
    weight = std * jax.random.normal(kw, (COUT, CIN, K, K, K), dtype=jnp.float32)

    out = jax.block_until_ready(conv_relu_block(x, weight))
    ref = jax.block_until_ready(_reference(x, weight))

    assert out.shape == ref.shape == (N, COUT, D, H, W)
    err = float(jnp.max(jnp.abs(out - ref)))
    scale = float(jnp.max(jnp.abs(ref))) + 1e-6
    # bf16 MXU inputs with f32 accumulation -> loosened tolerance vs f32 ref
    assert err <= 5e-2 * scale, f"mismatch vs lax conv reference: {err} (scale {scale})"

    print("KERNEL_OK")
</pallas_src>

<mosaic_0001>
module attributes {stable_mosaic.version = 11 : i64} {
  func.func @conv3d_relu_kernel(%arg0: i32, %arg1: i32, %arg2: memref<1x1x160x64xbf16, #tpu.memory_space<vmem>>, %arg3: memref<1x1x160x64xbf16, #tpu.memory_space<vmem>>, %arg4: memref<1x1x160x64xbf16, #tpu.memory_space<vmem>>, %arg5: memref<3x3x64x192xbf16, #tpu.memory_space<vmem>>, %arg6: memref<1x1x8x8x64xf32, #tpu.memory_space<vmem>>) attributes {dimension_semantics = [#tpu.dimension_semantics<parallel>, #tpu.dimension_semantics<parallel>], iteration_bounds = array<i64: 2, 4>, scalar_prefetch = 0 : i64, scratch_operands = 0 : i64, tpu.core_type = #tpu.core_type<tc>, window_params = [{transform_indices = @transform_0, window_bounds = array<i64: 1, 1, 160, 64>}, {transform_indices = @transform_1, window_bounds = array<i64: 1, 1, 160, 64>}, {transform_indices = @transform_2, window_bounds = array<i64: 1, 1, 160, 64>}, {pipeline_mode = #tpu.pipeline_mode<synchronous>, transform_indices = @transform_3, window_bounds = array<i64: 3, 3, 64, 192>}, {transform_indices = @transform_4, window_bounds = array<i64: 1, 1, 8, 8, 64>}]} {
    %cst = arith.constant 0.000000e+00 : f32
    %0 = vector.broadcast %cst : f32 to vector<128x192xf32>
    %c0 = arith.constant 0 : index
    %c0_0 = arith.constant 0 : index
    %c0_1 = arith.constant 0 : index
    %c0_2 = arith.constant 0 : index
    %1 = vector.load %arg2[%c0, %c0_0, %c0_1, %c0_2] : memref<1x1x160x64xbf16, #tpu.memory_space<vmem>>, vector<1x1x128x64xbf16>
    %2 = vector.shape_cast %1 : vector<1x1x128x64xbf16> to vector<128x64xbf16>
    %c0_3 = arith.constant 0 : index
    %c0_4 = arith.constant 0 : index
    %c0_5 = arith.constant 0 : index
    %c0_6 = arith.constant 0 : index
    %3 = vector.load %arg5[%c0_3, %c0_4, %c0_5, %c0_6] : memref<3x3x64x192xbf16, #tpu.memory_space<vmem>>, vector<1x1x64x192xbf16>
    %4 = vector.shape_cast %3 : vector<1x1x64x192xbf16> to vector<64x192xbf16>
    %cst_7 = arith.constant dense<0.000000e+00> : vector<128x192xf32>
    %5 = tpu.matmul %2, %4, %cst_7 {dimension_numbers = #tpu.dot_dimension_numbers<[1], [0], [0], [1], [0, 0, 1, 1], [], []>} : vector<128x64xbf16>, vector<64x192xbf16>, vector<128x192xf32> -> vector<128x192xf32>
    %6 = arith.addf %0, %5 : vector<128x192xf32>
    %c0_8 = arith.constant 0 : index
    %c0_9 = arith.constant 0 : index
    %c16 = arith.constant 16 : index
    %c0_10 = arith.constant 0 : index
    %7 = vector.load %arg2[%c0_8, %c0_9, %c16, %c0_10] : memref<1x1x160x64xbf16, #tpu.memory_space<vmem>>, vector<1x1x128x64xbf16>
    %8 = vector.shape_cast %7 : vector<1x1x128x64xbf16> to vector<128x64xbf16>
    %c0_11 = arith.constant 0 : index
    %c1 = arith.constant 1 : index
    %c0_12 = arith.constant 0 : index
    %c0_13 = arith.constant 0 : index
    %9 = vector.load %arg5[%c0_11, %c1, %c0_12, %c0_13] : memref<3x3x64x192xbf16, #tpu.memory_space<vmem>>, vector<1x1x64x192xbf16>
    %10 = vector.shape_cast %9 : vector<1x1x64x192xbf16> to vector<64x192xbf16>
    %cst_14 = arith.constant dense<0.000000e+00> : vector<128x192xf32>
    %11 = tpu.matmul %8, %10, %cst_14 {dimension_numbers = #tpu.dot_dimension_numbers<[1], [0], [0], [1], [0, 0, 1, 1], [], []>} : vector<128x64xbf16>, vector<64x192xbf16>, vector<128x192xf32> -> vector<128x192xf32>
    %12 = arith.addf %6, %11 : vector<128x192xf32>
    %c0_15 = arith.constant 0 : index
    %c0_16 = arith.constant 0 : index
    %c32 = arith.constant 32 : index
    %c0_17 = arith.constant 0 : index
    %13 = vector.load %arg2[%c0_15, %c0_16, %c32, %c0_17] : memref<1x1x160x64xbf16, #tpu.memory_space<vmem>>, vector<1x1x128x64xbf16>
    %14 = vector.shape_cast %13 : vector<1x1x128x64xbf16> to vector<128x64xbf16>
    %c0_18 = arith.constant 0 : index
    %c2 = arith.constant 2 : index
    %c0_19 = arith.constant 0 : index
    %c0_20 = arith.constant 0 : index
    %15 = vector.load %arg5[%c0_18, %c2, %c0_19, %c0_20] : memref<3x3x64x192xbf16, #tpu.memory_space<vmem>>, vector<1x1x64x192xbf16>
    %16 = vector.shape_cast %15 : vector<1x1x64x192xbf16> to vector<64x192xbf16>
    %cst_21 = arith.constant dense<0.000000e+00> : vector<128x192xf32>
    %17 = tpu.matmul %14, %16, %cst_21 {dimension_numbers = #tpu.dot_dimension_numbers<[1], [0], [0], [1], [0, 0, 1, 1], [], []>} : vector<128x64xbf16>, vector<64x192xbf16>, vector<128x192xf32> -> vector<128x192xf32>
    %18 = arith.addf %12, %17 : vector<128x192xf32>
    %c0_22 = arith.constant 0 : index
    %c0_23 = arith.constant 0 : index
    %c0_24 = arith.constant 0 : index
    %c0_25 = arith.constant 0 : index
    %19 = vector.load %arg3[%c0_22, %c0_23, %c0_24, %c0_25] : memref<1x1x160x64xbf16, #tpu.memory_space<vmem>>, vector<1x1x128x64xbf16>
    %20 = vector.shape_cast %19 : vector<1x1x128x64xbf16> to vector<128x64xbf16>
    %c1_26 = arith.constant 1 : index
    %c0_27 = arith.constant 0 : index
    %c0_28 = arith.constant 0 : index
    %c0_29 = arith.constant 0 : index
    %21 = vector.load %arg5[%c1_26, %c0_27, %c0_28, %c0_29] : memref<3x3x64x192xbf16, #tpu.memory_space<vmem>>, vector<1x1x64x192xbf16>
    %22 = vector.shape_cast %21 : vector<1x1x64x192xbf16> to vector<64x192xbf16>
    %cst_30 = arith.constant dense<0.000000e+00> : vector<128x192xf32>
    %23 = tpu.matmul %20, %22, %cst_30 {dimension_numbers = #tpu.dot_dimension_numbers<[1], [0], [0], [1], [0, 0, 1, 1], [], []>} : vector<128x64xbf16>, vector<64x192xbf16>, vector<128x192xf32> -> vector<128x192xf32>
    %24 = arith.addf %18, %23 : vector<128x192xf32>
    %c0_31 = arith.constant 0 : index
    %c0_32 = arith.constant 0 : index
    %c16_33 = arith.constant 16 : index
    %c0_34 = arith.constant 0 : index
    %25 = vector.load %arg3[%c0_31, %c0_32, %c16_33, %c0_34] : memref<1x1x160x64xbf16, #tpu.memory_space<vmem>>, vector<1x1x128x64xbf16>
    %26 = vector.shape_cast %25 : vector<1x1x128x64xbf16> to vector<128x64xbf16>
    %c1_35 = arith.constant 1 : index
    %c1_36 = arith.constant 1 : index
    %c0_37 = arith.constant 0 : index
    %c0_38 = arith.constant 0 : index
    %27 = vector.load %arg5[%c1_35, %c1_36, %c0_37, %c0_38] : memref<3x3x64x192xbf16, #tpu.memory_space<vmem>>, vector<1x1x64x192xbf16>
    %28 = vector.shape_cast %27 : vector<1x1x64x192xbf16> to vector<64x192xbf16>
    %cst_39 = arith.constant dense<0.000000e+00> : vector<128x192xf32>
    %29 = tpu.matmul %26, %28, %cst_39 {dimension_numbers = #tpu.dot_dimension_numbers<[1], [0], [0], [1], [0, 0, 1, 1], [], []>} : vector<128x64xbf16>, vector<64x192xbf16>, vector<128x192xf32> -> vector<128x192xf32>
    %30 = arith.addf %24, %29 : vector<128x192xf32>
    %c0_40 = arith.constant 0 : index
    %c0_41 = arith.constant 0 : index
    %c32_42 = arith.constant 32 : index
    %c0_43 = arith.constant 0 : index
    %31 = vector.load %arg3[%c0_40, %c0_41, %c32_42, %c0_43] : memref<1x1x160x64xbf16, #tpu.memory_space<vmem>>, vector<1x1x128x64xbf16>
    %32 = vector.shape_cast %31 : vector<1x1x128x64xbf16> to vector<128x64xbf16>
    %c1_44 = arith.constant 1 : index
    %c2_45 = arith.constant 2 : index
    %c0_46 = arith.constant 0 : index
    %c0_47 = arith.constant 0 : index
    %33 = vector.load %arg5[%c1_44, %c2_45, %c0_46, %c0_47] : memref<3x3x64x192xbf16, #tpu.memory_space<vmem>>, vector<1x1x64x192xbf16>
    %34 = vector.shape_cast %33 : vector<1x1x64x192xbf16> to vector<64x192xbf16>
    %cst_48 = arith.constant dense<0.000000e+00> : vector<128x192xf32>
    %35 = tpu.matmul %32, %34, %cst_48 {dimension_numbers = #tpu.dot_dimension_numbers<[1], [0], [0], [1], [0, 0, 1, 1], [], []>} : vector<128x64xbf16>, vector<64x192xbf16>, vector<128x192xf32> -> vector<128x192xf32>
    %36 = arith.addf %30, %35 : vector<128x192xf32>
    %c0_49 = arith.constant 0 : index
    %c0_50 = arith.constant 0 : index
    %c0_51 = arith.constant 0 : index
    %c0_52 = arith.constant 0 : index
    %37 = vector.load %arg4[%c0_49, %c0_50, %c0_51, %c0_52] : memref<1x1x160x64xbf16, #tpu.memory_space<vmem>>, vector<1x1x128x64xbf16>
    %38 = vector.shape_cast %37 : vector<1x1x128x64xbf16> to vector<128x64xbf16>
    %c2_53 = arith.constant 2 : index
    %c0_54 = arith.constant 0 : index
    %c0_55 = arith.constant 0 : index
    %c0_56 = arith.constant 0 : index
    %39 = vector.load %arg5[%c2_53, %c0_54, %c0_55, %c0_56] : memref<3x3x64x192xbf16, #tpu.memory_space<vmem>>, vector<1x1x64x192xbf16>
    %40 = vector.shape_cast %39 : vector<1x1x64x192xbf16> to vector<64x192xbf16>
    %cst_57 = arith.constant dense<0.000000e+00> : vector<128x192xf32>
    %41 = tpu.matmul %38, %40, %cst_57 {dimension_numbers = #tpu.dot_dimension_numbers<[1], [0], [0], [1], [0, 0, 1, 1], [], []>} : vector<128x64xbf16>, vector<64x192xbf16>, vector<128x192xf32> -> vector<128x192xf32>
    %42 = arith.addf %36, %41 : vector<128x192xf32>
    %c0_58 = arith.constant 0 : index
    %c0_59 = arith.constant 0 : index
    %c16_60 = arith.constant 16 : index
    %c0_61 = arith.constant 0 : index
    %43 = vector.load %arg4[%c0_58, %c0_59, %c16_60, %c0_61] : memref<1x1x160x64xbf16, #tpu.memory_space<vmem>>, vector<1x1x128x64xbf16>
    %44 = vector.shape_cast %43 : vector<1x1x128x64xbf16> to vector<128x64xbf16>
    %c2_62 = arith.constant 2 : index
    %c1_63 = arith.constant 1 : index
    %c0_64 = arith.constant 0 : index
    %c0_65 = arith.constant 0 : index
    %45 = vector.load %arg5[%c2_62, %c1_63, %c0_64, %c0_65] : memref<3x3x64x192xbf16, #tpu.memory_space<vmem>>, vector<1x1x64x192xbf16>
    %46 = vector.shape_cast %45 : vector<1x1x64x192xbf16> to vector<64x192xbf16>
    %cst_66 = arith.constant dense<0.000000e+00> : vector<128x192xf32>
    %47 = tpu.matmul %44, %46, %cst_66 {dimension_numbers = #tpu.dot_dimension_numbers<[1], [0], [0], [1], [0, 0, 1, 1], [], []>} : vector<128x64xbf16>, vector<64x192xbf16>, vector<128x192xf32> -> vector<128x192xf32>
    %48 = arith.addf %42, %47 : vector<128x192xf32>
    %c0_67 = arith.constant 0 : index
    %c0_68 = arith.constant 0 : index
    %c32_69 = arith.constant 32 : index
    %c0_70 = arith.constant 0 : index
    %49 = vector.load %arg4[%c0_67, %c0_68, %c32_69, %c0_70] : memref<1x1x160x64xbf16, #tpu.memory_space<vmem>>, vector<1x1x128x64xbf16>
    %50 = vector.shape_cast %49 : vector<1x1x128x64xbf16> to vector<128x64xbf16>
    %c2_71 = arith.constant 2 : index
    %c2_72 = arith.constant 2 : index
    %c0_73 = arith.constant 0 : index
    %c0_74 = arith.constant 0 : index
    %51 = vector.load %arg5[%c2_71, %c2_72, %c0_73, %c0_74] : memref<3x3x64x192xbf16, #tpu.memory_space<vmem>>, vector<1x1x64x192xbf16>
    %52 = vector.shape_cast %51 : vector<1x1x64x192xbf16> to vector<64x192xbf16>
    %cst_75 = arith.constant dense<0.000000e+00> : vector<128x192xf32>
    %53 = tpu.matmul %50, %52, %cst_75 {dimension_numbers = #tpu.dot_dimension_numbers<[1], [0], [0], [1], [0, 0, 1, 1], [], []>} : vector<128x64xbf16>, vector<64x192xbf16>, vector<128x192xf32> -> vector<128x192xf32>
    %54 = arith.addf %48, %53 : vector<128x192xf32>
    %55 = vector.extract_strided_slice %54 {offsets = [0, 0], sizes = [128, 64], strides = [1, 1]} : vector<128x192xf32> to vector<128x64xf32>
    %56 = vector.shape_cast %55 : vector<128x64xf32> to vector<8x16x64xf32>
    %57 = vector.extract_strided_slice %54 {offsets = [0, 64], sizes = [128, 64], strides = [1, 1]} : vector<128x192xf32> to vector<128x64xf32>
    %58 = vector.shape_cast %57 : vector<128x64xf32> to vector<8x16x64xf32>
    %59 = vector.extract_strided_slice %54 {offsets = [0, 128], sizes = [128, 64], strides = [1, 1]} : vector<128x192xf32> to vector<128x64xf32>
    %60 = vector.shape_cast %59 : vector<128x64xf32> to vector<8x16x64xf32>
    %61 = vector.extract_strided_slice %56 {offsets = [0, 0, 0], sizes = [8, 8, 64], strides = [1, 1, 1]} : vector<8x16x64xf32> to vector<8x8x64xf32>
    %62 = vector.extract_strided_slice %58 {offsets = [0, 1, 0], sizes = [8, 8, 64], strides = [1, 1, 1]} : vector<8x16x64xf32> to vector<8x8x64xf32>
    %63 = arith.addf %61, %62 : vector<8x8x64xf32>
    %64 = vector.extract_strided_slice %60 {offsets = [0, 2, 0], sizes = [8, 8, 64], strides = [1, 1, 1]} : vector<8x16x64xf32> to vector<8x8x64xf32>
    %65 = arith.addf %63, %64 : vector<8x8x64xf32>
    %cst_76 = arith.constant 0.000000e+00 : f32
    %66 = vector.broadcast %cst_76 : f32 to vector<8x8x64xf32>
    %67 = arith.maximumf %65, %66 : vector<8x8x64xf32>
    %c0_77 = arith.constant 0 : index
    %c0_78 = arith.constant 0 : index
    %c0_79 = arith.constant 0 : index
    %c0_80 = arith.constant 0 : index
    %c0_81 = arith.constant 0 : index
    %68 = vector.load %arg6[%c0_77, %c0_78, %c0_79, %c0_80, %c0_81] : memref<1x1x8x8x64xf32, #tpu.memory_space<vmem>>, vector<1x1x8x8x64xf32>
    %69 = vector.shape_cast %68 : vector<1x1x8x8x64xf32> to vector<8x8x64xf32>
    %70 = vector.shape_cast %67 : vector<8x8x64xf32> to vector<1x1x8x8x64xf32>
    tpu.vector_store %arg6[%c0_77, %c0_78, %c0_79, %c0_80, %c0_81], %70 {strides = array<i32>} : memref<1x1x8x8x64xf32, #tpu.memory_space<vmem>>, vector<1x1x8x8x64xf32>,
    return
  }
  func.func @transform_0(%arg0: i32, %arg1: i32) -> (i32, i32, i32, i32) {
    %c0_i32 = arith.constant 0 : i32
    %c0_i32_0 = arith.constant 0 : i32
    %c0_i32_1 = arith.constant 0 : i32
    return %arg0, %arg1, %c0_i32, %c0_i32_0 : i32, i32, i32, i32
  }
  func.func @transform_1(%arg0: i32, %arg1: i32) -> (i32, i32, i32, i32) {
    %c1_i32 = arith.constant 1 : i32
    %0 = arith.addi %arg1, %c1_i32 : i32
    %c0_i32 = arith.constant 0 : i32
    %c0_i32_0 = arith.constant 0 : i32
    %c0_i32_1 = arith.constant 0 : i32
    return %arg0, %0, %c0_i32, %c0_i32_0 : i32, i32, i32, i32
  }
  func.func @transform_2(%arg0: i32, %arg1: i32) -> (i32, i32, i32, i32) {
    %c2_i32 = arith.constant 2 : i32
    %0 = arith.addi %arg1, %c2_i32 : i32
    %c0_i32 = arith.constant 0 : i32
    %c0_i32_0 = arith.constant 0 : i32
    %c0_i32_1 = arith.constant 0 : i32
    return %arg0, %0, %c0_i32, %c0_i32_0 : i32, i32, i32, i32
  }
  func.func @transform_3(%arg0: i32, %arg1: i32) -> (i32, i32, i32, i32) {
    %c0_i32 = arith.constant 0 : i32
    %c0_i32_0 = arith.constant 0 : i32
    %c0_i32_1 = arith.constant 0 : i32
    %c0_i32_2 = arith.constant 0 : i32
    %c0_i32_3 = arith.constant 0 : i32
    return %c0_i32, %c0_i32_0, %c0_i32_1, %c0_i32_2 : i32, i32, i32, i32
  }
  func.func @transform_4(%arg0: i32, %arg1: i32) -> (i32, i32, i32, i32, i32) {
    %c0_i32 = arith.constant 0 : i32
    %c0_i32_0 = arith.constant 0 : i32
    %c0_i32_1 = arith.constant 0 : i32
    %c0_i32_2 = arith.constant 0 : i32
    return %arg0, %arg1, %c0_i32, %c0_i32_0, %c0_i32_1 : i32, i32, i32, i32, i32
  }
}

</mosaic_0001>

<llo_original>
// kernel: tpu_custom_call.1
$region0: #{tpu_custom_call.1}
  #allocation0 [shape = 'u32[]', space=smem, size = 0x4, offset = 0x4, fixed_abs, tag = 'smem constant byte address 0x4 - core index']
  #allocation1 [shape = 'u32[144,128]{1,0:T(1,128)}', space=vmem, size = 0x12000, scoped, tag = 'internal scratch']
  %s0 = inlined_call_operand.vmem [shape: bf16[2,6,160,64], index: 0, kind: input, shape index: {}]
  %s1 = inlined_call_operand.vmem [shape: bf16[2,6,160,64], index: 1, kind: input, shape index: {}]
  %s2 = inlined_call_operand.vmem [shape: bf16[2,6,160,64], index: 2, kind: input, shape index: {}]
  %s3 = inlined_call_operand.vmem [shape: bf16[3,3,64,192], index: 3, kind: input, shape index: {}]
  %s4 = inlined_call_operand.hbm [shape: f32[2,4,8,8,64], index: 4, kind: output, shape index: {}]
  %s5 = sld [smem:[#allocation0]]
  $region49: #{tpu_custom_call.1} parent=0
    _
  %s7 = ssub.s32 1, %s5
  %s8 = scalar_select 0, %s7, %s5
  $region1: #{tpu_custom_call.1} parent=0
    #allocation2 [shape = 'u8[65536]{0}', space=vmem, size = 0x10000, scoped, tag = 'output window, operand 0']
    #allocation3 [shape = 's32[2]{0}', space=sflag, size = 0x8, scoped, tag = 'scoped memory for tpu_custom_call.1']
    %9 = vsyncpa [#allocation3], 0
    %s10 = scalar_lea.sflag [#allocation3], 1
    %11 = vsyncpa %s10, 0
    loop: start=0, step=1, limit=10
    $region2: #{tpu_custom_call.1} parent=1 // loop_pre_header
      _
    $region3: #{tpu_custom_call.1} parent=1 // loop_header
      %s13 = sphi 0, %s17
      %p14 = scmp.ge.s32.totalorder %s13, 10
      %s20 = sphi 0, %s32
      %s21 = sphi 0, %s28
      %s22 = sphi 0, %s20
      %s23 = sphi 0, %s21
      %s24 = sphi 0, %s22
      %s25 = sphi 0, %s23
      %s37 = sphi 0, %s39
      %s40 = sphi 0, %s37
      %s41 = sphi 0, %s40
      %s57 = sphi 0, %s41
      %s67 = sphi 0, %s69
      %s70 = sphi 0, %s67
      %s71 = sphi 0, %s70
      %s87 = sphi 0, %s71
      %s97 = sphi 0, %s99
      %s100 = sphi 0, %s97
      %s101 = sphi 0, %s100
      %s117 = sphi 0, %s101
      %s121 = sphi 0, %s121
      %s123 = sphi 0, %s121
      %s124 = sphi 0, %s123
      %s138 = sphi 0, %s124
      %s146 = sphi 0, %s148
      %s149 = sphi 0, %s146
      %s150 = sphi 0, %s149
      %s166 = sphi 0, %s150
    $region4: #{tpu_custom_call.1} parent=1 // loop_header_branch
      %16 = sbr.rel (%p14) target = $region8
    $region5: #{tpu_custom_call.1} parent=1 // loop_body
      %s18 = ssub.s32 %s13, 1
      %s19 = ssub.s32 %s13, 2
      %s26 = sadd.s32 1, %s21
      %p27 = scmp.ge.s32.totalorder %s26, 4
      %s28 = scalar_select %p27, 0, %s26
      %s29 = sadd.s32 1, %s20
      %s30 = scalar_select %p27, %s29, %s20
      %p31 = scmp.ge.s32.totalorder %s30, 2
      %s32 = scalar_select %p31, 0, %s30
      %s33 = ssub.s32 %s20, %s32
      %s34 = ssub.s32 %s21, %s28
      %s35 = sor.u32 %s33, %s34
      %p36 = scmp.eq.s32.totalorder %s35, 0
      %s38 = sadd.s32 %s37, 1
      %s39 = scalar_select %p36, %s37, %s38
      %p42 = pneg %p36
      %p43 = scmp.eq.s32.totalorder %s13, 7
      %p44 = por %p42, %p43
      %p45 = scmp.ne.s32.totalorder %s37, %s40
      %p46 = scmp.eq.s32.totalorder %s13, 0
      %p47 = por %p45, %p46
      %p48 = scmp.ne.s32.totalorder %s37, %s40
      %p49 = scmp.eq.s32.totalorder %s18, 7
      %p50 = por %p48, %p49
      %p51 = scmp.ne.s32.totalorder %s40, %s41
      %p52 = scmp.eq.s32.totalorder %s18, 0
      %p53 = por %p51, %p52
      %p54 = scmp.ne.s32.totalorder %s40, %s41
      %p55 = scmp.eq.s32.totalorder %s19, 7
      %p56 = por %p54, %p55
      %p58 = scmp.ne.s32.totalorder %s41, %s57
      %p59 = scmp.eq.s32.totalorder %s19, 0
      %p60 = por %p58, %p59
      %s61 = sadd.s32 %s21, 1
      %s62 = sadd.s32 %s28, 1
      %s63 = ssub.s32 %s20, %s32
      %s64 = ssub.s32 %s61, %s62
      %s65 = sor.u32 %s63, %s64
      %p66 = scmp.eq.s32.totalorder %s65, 0
      %s68 = sadd.s32 %s67, 1
      %s69 = scalar_select %p66, %s67, %s68
      %p72 = pneg %p66
      %p73 = scmp.eq.s32.totalorder %s13, 7
      %p74 = por %p72, %p73
      %p75 = scmp.ne.s32.totalorder %s67, %s70
      %p76 = scmp.eq.s32.totalorder %s13, 0
      %p77 = por %p75, %p76
      %p78 = scmp.ne.s32.totalorder %s67, %s70
      %p79 = scmp.eq.s32.totalorder %s18, 7
      %p80 = por %p78, %p79
      %p81 = scmp.ne.s32.totalorder %s70, %s71
      %p82 = scmp.eq.s32.totalorder %s18, 0
      %p83 = por %p81, %p82
      %p84 = scmp.ne.s32.totalorder %s70, %s71
      %p85 = scmp.eq.s32.totalorder %s19, 7
      %p86 = por %p84, %p85
      %p88 = scmp.ne.s32.totalorder %s71, %s87
      %p89 = scmp.eq.s32.totalorder %s19, 0
      %p90 = por %p88, %p89
      %s91 = sadd.s32 %s21, 2
      %s92 = sadd.s32 %s28, 2
      %s93 = ssub.s32 %s20, %s32
      %s94 = ssub.s32 %s91, %s92
      %s95 = sor.u32 %s93, %s94
      %p96 = scmp.eq.s32.totalorder %s95, 0
      %s98 = sadd.s32 %s97, 1
      %s99 = scalar_select %p96, %s97, %s98
      %p102 = pneg %p96
      %p103 = scmp.eq.s32.totalorder %s13, 7
      %p104 = por %p102, %p103
      %p105 = scmp.ne.s32.totalorder %s97, %s100
      %p106 = scmp.eq.s32.totalorder %s13, 0
      %p107 = por %p105, %p106
      %p108 = scmp.ne.s32.totalorder %s97, %s100
      %p109 = scmp.eq.s32.totalorder %s18, 7
      %p110 = por %p108, %p109
      %p111 = scmp.ne.s32.totalorder %s100, %s101
      %p112 = scmp.eq.s32.totalorder %s18, 0
      %p113 = por %p111, %p112
      %p114 = scmp.ne.s32.totalorder %s100, %s101
      %p115 = scmp.eq.s32.totalorder %s19, 7
      %p116 = por %p114, %p115
      %p118 = scmp.ne.s32.totalorder %s101, %s117
      %p119 = scmp.eq.s32.totalorder %s19, 0
      %p120 = por %p118, %p119
      %s122 = sadd.s32 %s121, 1
      %p125 = scmp.eq.s32.totalorder %s13, 7
      %p126 = scmp.ne.s32.totalorder %s121, %s123
      %p127 = scmp.eq.s32.totalorder %s13, 0
      %p128 = por %p126, %p127
      %p129 = scmp.ne.s32.totalorder %s121, %s123
      %p130 = scmp.eq.s32.totalorder %s18, 7
      %p131 = por %p129, %p130
      %p132 = scmp.ne.s32.totalorder %s123, %s124
      %p133 = scmp.eq.s32.totalorder %s18, 0
      %p134 = por %p132, %p133
      %p135 = scmp.ne.s32.totalorder %s123, %s124
      %p136 = scmp.eq.s32.totalorder %s19, 7
      %p137 = por %p135, %p136
      %p139 = scmp.ne.s32.totalorder %s124, %s138
      %p140 = scmp.eq.s32.totalorder %s19, 0
      %p141 = por %p139, %p140
      %s142 = ssub.s32 %s20, %s32
      %s143 = ssub.s32 %s21, %s28
      %s144 = sor.u32 %s142, %s143
      %p145 = scmp.eq.s32.totalorder %s144, 0
      %s147 = sadd.s32 %s146, 1
      %s148 = scalar_select %p145, %s146, %s147
      %p151 = pneg %p145
      %p152 = scmp.eq.s32.totalorder %s13, 7
      %p153 = por %p151, %p152
      %p154 = scmp.ne.s32.totalorder %s146, %s149
      %p155 = scmp.eq.s32.totalorder %s13, 0
      %p156 = por %p154, %p155
      %p157 = scmp.ne.s32.totalorder %s146, %s149
      %p158 = scmp.eq.s32.totalorder %s18, 7
      %p159 = por %p157, %p158
      %p160 = scmp.ne.s32.totalorder %s149, %s150
      %p161 = scmp.eq.s32.totalorder %s18, 0
      %p162 = por %p160, %p161
      %p163 = scmp.ne.s32.totalorder %s149, %s150
      %p164 = scmp.eq.s32.totalorder %s19, 7
      %p165 = por %p163, %p164
      %p167 = scmp.ne.s32.totalorder %s150, %s166
      %p168 = scmp.eq.s32.totalorder %s19, 0
      %p169 = por %p167, %p168
      %p170 = scmp.le.s32.totalorder 1, %s13
      %p171 = scmp.lt.s32.totalorder %s13, 9
      %p172 = pnand %p170, %p171
      %p173 = pneg %p172
      // Predicated region
      $region9: #{tpu_custom_call.1} parent=5 // pred_check
        _
      $region10: #{tpu_custom_call.1} parent=5 // pred_check_branch
        %175 = sbr.rel (%p172) target = $region12
      $region11: #{tpu_custom_call.1} parent=5 // pred_region
        %s176 = ssub.s32 %s13, 1
        // Predicated region
        $region13: #{tpu_custom_call.1} parent=11 // pred_check
          %p177 = pneg %p134
        $region14: #{tpu_custom_call.1} parent=11 // pred_check_branch
          %179 = sbr.rel (%p177) target = $region16
        $region15: #{tpu_custom_call.1} parent=11 // pred_region
          _
        $region16: #{tpu_custom_call.1} parent=11 // pred_fallthru
          _
      $region12: #{tpu_custom_call.1} parent=5 // pred_fallthru
        _
      %p180 = scmp.lt.s32.totalorder %s13, 8
      // Predicated region
      $region17: #{tpu_custom_call.1} parent=5 // pred_check
        %p181 = pneg %p180
      $region18: #{tpu_custom_call.1} parent=5 // pred_check_branch
        %183 = sbr.rel (%p181) target = $region20
      $region19: #{tpu_custom_call.1} parent=5 // pred_region
        // Predicated region
        $region21: #{tpu_custom_call.1} parent=19 // pred_check
          %p184 = pneg %p47
        $region22: #{tpu_custom_call.1} parent=19 // pred_check_branch
          %186 = sbr.rel (%p184) target = $region24
        $region23: #{tpu_custom_call.1} parent=19 // pred_region
          %p187 = scmp.lt.s32.totalorder %s20, 1
          %s188 = scalar_select %p187, %s20, 1
          %p189 = scmp.lt.s32.totalorder %s21, 5
          %s190 = scalar_select %p189, %s21, 5
          %s191 = smul.addr %s190, 20
          %s192 = smul.addr %s188, 120
          %s193 = sadd.s32 %s191, %s192
          %s194 = smul.addr %s193, 4
          %s195 = scalar_lea.vmem %s0, %s194
        $region24: #{tpu_custom_call.1} parent=19 // pred_fallthru
          _
        // Predicated region
        $region25: #{tpu_custom_call.1} parent=19 // pred_check
          %p196 = pneg %p77
        $region26: #{tpu_custom_call.1} parent=19 // pred_check_branch
          %198 = sbr.rel (%p196) target = $region28
        $region27: #{tpu_custom_call.1} parent=19 // pred_region
          %s199 = sadd.s32 %s21, 1
          %p200 = scmp.lt.s32.totalorder %s20, 1
          %s201 = scalar_select %p200, %s20, 1
          %p202 = scmp.lt.s32.totalorder %s199, 5
          %s203 = scalar_select %p202, %s199, 5
          %s204 = smul.addr %s203, 20
          %s205 = smul.addr %s201, 120
          %s206 = sadd.s32 %s204, %s205
          %s207 = smul.addr %s206, 4
          %s208 = scalar_lea.vmem %s1, %s207
          %s209 = sadd.s32 %s21, 1
        $region28: #{tpu_custom_call.1} parent=19 // pred_fallthru
          _
        // Predicated region
        $region29: #{tpu_custom_call.1} parent=19 // pred_check
          %p210 = pneg %p107
        $region30: #{tpu_custom_call.1} parent=19 // pred_check_branch
          %212 = sbr.rel (%p210) target = $region32
        $region31: #{tpu_custom_call.1} parent=19 // pred_region
          %s213 = sadd.s32 %s21, 2
          %p214 = scmp.lt.s32.totalorder %s20, 1
          %s215 = scalar_select %p214, %s20, 1
          %p216 = scmp.lt.s32.totalorder %s213, 5
          %s217 = scalar_select %p216, %s213, 5
          %s218 = smul.addr %s217, 20
          %s219 = smul.addr %s215, 120
          %s220 = sadd.s32 %s218, %s219
          %s221 = smul.addr %s220, 4
          %s222 = scalar_lea.vmem %s2, %s221
          %s223 = sadd.s32 %s21, 2
        $region32: #{tpu_custom_call.1} parent=19 // pred_fallthru
          _
      $region20: #{tpu_custom_call.1} parent=5 // pred_fallthru
        _
      %p224 = scmp.le.s32.totalorder 1, %s13
      %p225 = scmp.lt.s32.totalorder %s13, 9
      %p226 = pnand %p224, %p225
      %p227 = pneg %p226
      // Predicated region
      $region33: #{tpu_custom_call.1} parent=5 // pred_check
        _
      $region34: #{tpu_custom_call.1} parent=5 // pred_check_branch
        %229 = sbr.rel (%p226) target = $region36
      $region35: #{tpu_custom_call.1} parent=5 // pred_region
        %s230 = ssub.s32 %s13, 1
        %p231 = scmp.lt.s32.totalorder %s22, 1
        %s232 = scalar_select %p231, %s22, 1
        %p233 = scmp.lt.s32.totalorder %s23, 5
        %s234 = scalar_select %p233, %s23, 5
        %s235 = smul.addr %s234, 20
        %s236 = smul.addr %s232, 120
        %s237 = sadd.s32 %s235, %s236
        %s238 = smul.addr %s237, 4
        %s239 = scalar_lea.vmem %s0, %s238
        %p240 = pneg %p53
        %p241 = pneg %p50
        %s242 = sadd.s32 %s23, 1
        %p243 = scmp.lt.s32.totalorder %s22, 1
        %s244 = scalar_select %p243, %s22, 1
        %p245 = scmp.lt.s32.totalorder %s242, 5
        %s246 = scalar_select %p245, %s242, 5
        %s247 = smul.addr %s246, 20
        %s248 = smul.addr %s244, 120
        %s249 = sadd.s32 %s247, %s248
        %s250 = smul.addr %s249, 4
        %s251 = scalar_lea.vmem %s1, %s250
        %p252 = pneg %p83
        %p253 = pneg %p80
        %s254 = sadd.s32 %s23, 2
        %p255 = scmp.lt.s32.totalorder %s22, 1
        %s256 = scalar_select %p255, %s22, 1
        %p257 = scmp.lt.s32.totalorder %s254, 5
        %s258 = scalar_select %p257, %s254, 5
        %s259 = smul.addr %s258, 20
        %s260 = smul.addr %s256, 120
        %s261 = sadd.s32 %s259, %s260
        %s262 = smul.addr %s261, 4
        %s263 = scalar_lea.vmem %s2, %s262
        %p264 = pneg %p113
        %p265 = pneg %p110
        %p266 = pneg %p134
        %p267 = pneg %p131
        %p268 = pneg %p162
        %p269 = pneg %p159
        %s270 = sand.u32 %s149, 1
        %s271 = scalar_lea.sflag [#allocation3], %s270
        %s272 = sand.u32 %s149, 1
        %s273 = smul.addr %s272, 64
        %s274 = scalar_lea.vmem [#allocation2], %s273
        %p275 = scmp.lt.s32.totalorder %s22, 1
        %s276 = scalar_select %p275, %s22, 1
        %p277 = scmp.lt.s32.totalorder %s23, 5
        %s278 = scalar_select %p277, %s23, 5
        %s279 = smul.addr %s278, 20
        %s280 = smul.addr %s276, 120
        %s281 = sadd.s32 %s279, %s280
        %s282 = smul.addr %s281, 4
        %s283 = scalar_lea.vmem %s0, %s282
        %s284 = sadd.s32 %s23, 1
        %p285 = scmp.lt.s32.totalorder %s22, 1
        %s286 = scalar_select %p285, %s22, 1
        %p287 = scmp.lt.s32.totalorder %s284, 5
        %s288 = scalar_select %p287, %s284, 5
        %s289 = smul.addr %s288, 20
        %s290 = smul.addr %s286, 120
        %s291 = sadd.s32 %s289, %s290
        %s292 = smul.addr %s291, 4
        %s293 = scalar_lea.vmem %s1, %s292
        %s294 = sadd.s32 %s23, 1
        %s295 = sadd.s32 %s23, 2
        %p296 = scmp.lt.s32.totalorder %s22, 1
        %s297 = scalar_select %p296, %s22, 1
        %p298 = scmp.lt.s32.totalorder %s295, 5
        %s299 = scalar_select %p298, %s295, 5
        %s300 = smul.addr %s299, 20
        %s301 = smul.addr %s297, 120
        %s302 = sadd.s32 %s300, %s301
        %s303 = smul.addr %s302, 4
        %s304 = scalar_lea.vmem %s2, %s303
        %s305 = sadd.s32 %s23, 2
        %v307 = vld [vmem:[%s283] sm:$0xf]
        %v308 = vld [vmem:[%s283 + $0x4] sm:$0xf]
        %v309 = vld [vmem:[%s283 + $0x8] sm:$0xf]
        %v310 = vld [vmem:[%s283 + $0xc] sm:$0xf]
        %v311 = vld [vmem:[%s283 + $0x10] sm:$0xf]
        %v312 = vld [vmem:[%s283 + $0x14] sm:$0xf]
        %v313 = vld [vmem:[%s283 + $0x18] sm:$0xf]
        %v314 = vld [vmem:[%s283 + $0x1c] sm:$0xf]
        %v315 = vld [vmem:[%s283 + $0x20] sm:$0xf]
        %v316 = vld [vmem:[%s283 + $0x24] sm:$0xf]
        %v317 = vld [vmem:[%s283 + $0x28] sm:$0xf]
        %v318 = vld [vmem:[%s283 + $0x2c] sm:$0xf]
        %v319 = vld [vmem:[%s283 + $0x30] sm:$0xf]
        %v320 = vld [vmem:[%s283 + $0x34] sm:$0xf]
        %v321 = vld [vmem:[%s283 + $0x38] sm:$0xf]
        %v322 = vld [vmem:[%s283 + $0x3c] sm:$0xf]
        %v323 = vld [vmem:[%s3] sm:$0xff]
        %v324 = vld [vmem:[%s3 + $0x8] sm:$0xff]
        %v325 = vld [vmem:[%s3 + $0x10] sm:$0xff]
        %v326 = vld [vmem:[%s3 + $0x18] sm:$0xff]
        %v327 = vld [vmem:[%s3 + $0x20] sm:$0xff]
        %v328 = vld [vmem:[%s3 + $0x28] sm:$0xff]
        %v329 = vld [vmem:[%s3 + $0x30] sm:$0xff]
        %v330 = vld [vmem:[%s3 + $0x38] sm:$0xff]
        %v331 = vld [vmem:[%s283 + $0x40] sm:$0xf]
        %v332 = vld [vmem:[%s283 + $0x44] sm:$0xf]
        %s333 = scalar_lea.vmem %s3, 64
        %v334 = vld [vmem:[%s333] sm:$0xff]
        %v335 = vld [vmem:[%s333 + $0x8] sm:$0xff]
        %v336 = vld [vmem:[%s333 + $0x10] sm:$0xff]
        %v337 = vld [vmem:[%s333 + $0x18] sm:$0xff]
        %v338 = vld [vmem:[%s333 + $0x20] sm:$0xff]
        %v339 = vld [vmem:[%s333 + $0x28] sm:$0xff]
        %v340 = vld [vmem:[%s333 + $0x30] sm:$0xff]
        %v341 = vld [vmem:[%s333 + $0x38] sm:$0xff]
        %v358 = vunpack.c.l.b16 %v309
        %v359 = vunpack.c.l.b16 %v310
        %v360 = vunpack.c.l.b16 %v311
        %v361 = vunpack.c.l.b16 %v312
        %v362 = vunpack.c.l.b16 %v313
        %v363 = vunpack.c.l.b16 %v314
        %v364 = vunpack.c.l.b16 %v315
        %v365 = vunpack.c.l.b16 %v316
        %v366 = vunpack.c.l.b16 %v317
        %v367 = vunpack.c.l.b16 %v318
        %v368 = vunpack.c.l.b16 %v319
        %v369 = vunpack.c.l.b16 %v320
        %v370 = vunpack.c.l.b16 %v321
        %v371 = vunpack.c.l.b16 %v322
        %v372 = vunpack.c.l.b16 %v331
        %v373 = vunpack.c.l.b16 %v332
        %v374 = vpack.c.b16 %v359, %v358
        %v375 = vpack.c.b16 %v361, %v360
        %v376 = vpack.c.b16 %v363, %v362
        %v377 = vpack.c.b16 %v365, %v364
        %v378 = vpack.c.b16 %v367, %v366
        %v379 = vpack.c.b16 %v369, %v368
        %v380 = vpack.c.b16 %v371, %v370
        %v381 = vpack.c.b16 %v373, %v372
        %v390 = vunpack.c.l.b16 %v334
        %v391 = vunpack.c.h.b16 %v334
        %v392 = vunpack.c.l.b16 %v335
        %v393 = vunpack.c.h.b16 %v335
        %v394 = vunpack.c.l.b16 %v336
        %v395 = vunpack.c.h.b16 %v336
        %v396 = vunpack.c.l.b16 %v337
        %v397 = vunpack.c.h.b16 %v337
        %v398 = vunpack.c.l.b16 %v338
        %v399 = vunpack.c.h.b16 %v338
        %v400 = vunpack.c.l.b16 %v339
        %v401 = vunpack.c.h.b16 %v339
        %v402 = vunpack.c.l.b16 %v340
        %v403 = vunpack.c.h.b16 %v340
        %v404 = vunpack.c.l.b16 %v341
        %v405 = vunpack.c.h.b16 %v341
        %v406 = vpack.c.b16 %v392, %v390
        %v407 = vpack.c.b16 %v393, %v391
        %v408 = vpack.c.b16 %v396, %v394
        %v409 = vpack.c.b16 %v397, %v395
        %v410 = vpack.c.b16 %v400, %v398
        %v411 = vpack.c.b16 %v401, %v399
        %v412 = vpack.c.b16 %v404, %v402
        %v413 = vpack.c.b16 %v405, %v403
        %vm422 = vcmask 523264
        %v424 = vsel %vm422, %v374, 0
        %v427 = vsel %vm422, %v375, 0
        %v430 = vsel %vm422, %v376, 0
        %v433 = vsel %vm422, %v377, 0
        %v436 = vsel %vm422, %v378, 0
        %v439 = vsel %vm422, %v379, 0
        %v442 = vsel %vm422, %v380, 0
        %v445 = vsel %vm422, %v381, 0
        %447 = vmatprep.subr.bf16.mxu0 0
        %448 = vmatpush1.bf16.msra.mxu0 0
        %449 = vmatprep.subr.bf16.mxu0 0
        %450 = vmatpush1.bf16.msra.mxu0 0
        %451 = vmatprep.subr.bf16.mxu0 0
        %452 = vmatpush1.bf16.msra.mxu0 0
        %453 = vmatprep.subr.bf16.mxu0 0
        %454 = vmatpush1.bf16.msra.mxu0 0
        %455 = vmatprep.subr.bf16.mxu0 %v413
        %456 = vmatpush1.bf16.msra.mxu0 %v412
        %457 = vmatprep.subr.bf16.mxu0 %v411
        %458 = vmatpush1.bf16.msra.mxu0 %v410
        %459 = vmatprep.subr.bf16.mxu0 %v409
        %460 = vmatpush1.bf16.msra.mxu0 %v408
        %461 = vmatprep.subr.bf16.mxu0 %v407
        %462 = vmatpush1.bf16.msra.mxu0 %v406
        %463 = vmatprep.subr.bf16.mxu0 0
        %464 = vmatpush2.bf16.msra.mxu0 0
        %465 = vmatprep.subr.bf16.mxu0 0
        %466 = vmatpush2.bf16.msra.mxu0 0
        %467 = vmatprep.subr.bf16.mxu0 0
        %468 = vmatpush2.bf16.msra.mxu0 0
        %469 = vmatprep.subr.bf16.mxu0 0
        %470 = vmatpush2.bf16.msra.mxu0 0
        %471 = vmatprep.subr.bf16.mxu0 0
        %472 = vmatpush2.bf16.msra.mxu0 0
        %473 = vmatprep.subr.bf16.mxu0 0
        %474 = vmatpush2.bf16.msra.mxu0 0
        %475 = vmatprep.subr.bf16.mxu0 0
        %476 = vmatpush2.bf16.msra.mxu0 0
        %477 = vmatprep.subr.bf16.mxu0 0
        %478 = vmatpush2.bf16.msra.mxu0 0
        %479 = vmatprep.mubr.bf16.mxu0 0
        %480 = vmatmul.mubr.bf16.gmra.mxu0 %v424
        %v481 = vpop.f32.mrf.mxu0
        %v482 = vadd.f32 0.0, %v481
        %v483 = vpop.f32.mrf.mxu0
        %v484 = vadd.f32 0.0, %v483
        %v485 = vpop.f32.mrf.mxu0
        %v486 = vadd.f32 0.0, %v485
        %v487 = vpop.f32.mrf.mxu0
        %v488 = vadd.f32 0.0, %v487
        %489 = vmatprep.mubr.bf16.mxu0 0
        %490 = vmatmul.mubr.bf16.gmra.mxu0 %v427
        %v491 = vpop.f32.mrf.mxu0
        %v492 = vadd.f32 0.0, %v491
        %v493 = vpop.f32.mrf.mxu0
        %v494 = vadd.f32 0.0, %v493
        %v495 = vpop.f32.mrf.mxu0
        %v496 = vadd.f32 0.0, %v495
        %v497 = vpop.f32.mrf.mxu0
        %v498 = vadd.f32 0.0, %v497
        %499 = vmatprep.mubr.bf16.mxu0 0
        %500 = vmatmul.mubr.bf16.gmra.mxu0 %v430
        %v501 = vpop.f32.mrf.mxu0
        %v502 = vadd.f32 0.0, %v501
        %v503 = vpop.f32.mrf.mxu0
        %v504 = vadd.f32 0.0, %v503
        %v505 = vpop.f32.mrf.mxu0
        %v506 = vadd.f32 0.0, %v505
        %v507 = vpop.f32.mrf.mxu0
        %v508 = vadd.f32 0.0, %v507
        %509 = vmatprep.mubr.bf16.mxu0 0
        %510 = vmatmul.mubr.bf16.gmra.mxu0 %v433
        %v511 = vpop.f32.mrf.mxu0
        %v512 = vadd.f32 0.0, %v511
        %v513 = vpop.f32.mrf.mxu0
        %v514 = vadd.f32 0.0, %v513
        %v515 = vpop.f32.mrf.mxu0
        %v516 = vadd.f32 0.0, %v515
        %v517 = vpop.f32.mrf.mxu0
        %v518 = vadd.f32 0.0, %v517
        %519 = vmatprep.mubr.bf16.mxu0 0
        %520 = vmatmul.mubr.bf16.gmra.mxu0 %v436
        %v521 = vpop.f32.mrf.mxu0
        %v522 = vadd.f32 0.0, %v521
        %v523 = vpop.f32.mrf.mxu0
        %v524 = vadd.f32 0.0, %v523
        %v525 = vpop.f32.mrf.mxu0
        %v526 = vadd.f32 0.0, %v525
        %v527 = vpop.f32.mrf.mxu0
        %v528 = vadd.f32 0.0, %v527
        %529 = vmatprep.mubr.bf16.mxu0 0
        %530 = vmatmul.mubr.bf16.gmra.mxu0 %v439
        %v531 = vpop.f32.mrf.mxu0
        %v532 = vadd.f32 0.0, %v531
        %v533 = vpop.f32.mrf.mxu0
        %v534 = vadd.f32 0.0, %v533
        %v535 = vpop.f32.mrf.mxu0
        %v536 = vadd.f32 0.0, %v535
        %v537 = vpop.f32.mrf.mxu0
        %v538 = vadd.f32 0.0, %v537
        %539 = vmatprep.mubr.bf16.mxu0 0
        %540 = vmatmul.mubr.bf16.gmra.mxu0 %v442
        %v541 = vpop.f32.mrf.mxu0
        %v542 = vadd.f32 0.0, %v541
        %v543 = vpop.f32.mrf.mxu0
        %v544 = vadd.f32 0.0, %v543
        %v545 = vpop.f32.mrf.mxu0
        %v546 = vadd.f32 0.0, %v545
        %v547 = vpop.f32.mrf.mxu0
        %v548 = vadd.f32 0.0, %v547
        %549 = vmatprep.mubr.bf16.mxu0 0
        %550 = vmatmul.mubr.bf16.gmra.mxu0 %v445
        %v551 = vpop.f32.mrf.mxu0
        %v552 = vadd.f32 0.0, %v551
        %v553 = vpop.f32.mrf.mxu0
        %v554 = vadd.f32 0.0, %v553
        %v555 = vpop.f32.mrf.mxu0
        %v556 = vadd.f32 0.0, %v555
        %v557 = vpop.f32.mrf.mxu0
        %v558 = vadd.f32 0.0, %v557
        %559 = vdwg.mxu0
        %v562 = vunpack.c.l.b16 %v307
        %v563 = vunpack.c.l.b16 %v308
        %v564 = vpack.c.b16 %v563, %v562
        %v573 = vunpack.c.l.b16 %v323
        %v574 = vunpack.c.h.b16 %v323
        %v575 = vunpack.c.l.b16 %v324
        %v576 = vunpack.c.h.b16 %v324
        %v577 = vunpack.c.l.b16 %v325
        %v578 = vunpack.c.h.b16 %v325
        %v579 = vunpack.c.l.b16 %v326
        %v580 = vunpack.c.h.b16 %v326
        %v581 = vunpack.c.l.b16 %v327
        %v582 = vunpack.c.h.b16 %v327
        %v583 = vunpack.c.l.b16 %v328
        %v584 = vunpack.c.h.b16 %v328
        %v585 = vunpack.c.l.b16 %v329
        %v586 = vunpack.c.h.b16 %v329
        %v587 = vunpack.c.l.b16 %v330
        %v588 = vunpack.c.h.b16 %v330
        %v589 = vpack.c.b16 %v575, %v573
        %v590 = vpack.c.b16 %v576, %v574
        %v591 = vpack.c.b16 %v579, %v577
        %v592 = vpack.c.b16 %v580, %v578
        %v593 = vpack.c.b16 %v583, %v581
        %v594 = vpack.c.b16 %v584, %v582
        %v595 = vpack.c.b16 %v587, %v585
        %v596 = vpack.c.b16 %v588, %v586
        %v606 = vsel %vm422, %v564, 0
        %608 = vmatprep.subr.bf16.mxu0 0
        %609 = vmatpush1.bf16.msra.mxu0 0
        %610 = vmatprep.subr.bf16.mxu0 0
        %611 = vmatpush1.bf16.msra.mxu0 0
        %612 = vmatprep.subr.bf16.mxu0 0
        %613 = vmatpush1.bf16.msra.mxu0 0
        %614 = vmatprep.subr.bf16.mxu0 0
        %615 = vmatpush1.bf16.msra.mxu0 0
        %616 = vmatprep.subr.bf16.mxu0 %v596
        %617 = vmatpush1.bf16.msra.mxu0 %v595
        %618 = vmatprep.subr.bf16.mxu0 %v594
        %619 = vmatpush1.bf16.msra.mxu0 %v593
        %620 = vmatprep.subr.bf16.mxu0 %v592
        %621 = vmatpush1.bf16.msra.mxu0 %v591
        %622 = vmatprep.subr.bf16.mxu0 %v590
        %623 = vmatpush1.bf16.msra.mxu0 %v589
        %624 = vmatprep.subr.bf16.mxu0 0
        %625 = vmatpush2.bf16.msra.mxu0 0
        %626 = vmatprep.subr.bf16.mxu0 0
        %627 = vmatpush2.bf16.msra.mxu0 0
        %628 = vmatprep.subr.bf16.mxu0 0
        %629 = vmatpush2.bf16.msra.mxu0 0
        %630 = vmatprep.subr.bf16.mxu0 0
        %631 = vmatpush2.bf16.msra.mxu0 0
        %632 = vmatprep.subr.bf16.mxu0 0
        %633 = vmatpush2.bf16.msra.mxu0 0
        %634 = vmatprep.subr.bf16.mxu0 0
        %635 = vmatpush2.bf16.msra.mxu0 0
        %636 = vmatprep.subr.bf16.mxu0 0
        %637 = vmatpush2.bf16.msra.mxu0 0
        %638 = vmatprep.subr.bf16.mxu0 0
        %639 = vmatpush2.bf16.msra.mxu0 0
        %640 = vmatprep.mubr.bf16.mxu0 0
        %641 = vmatmul.mubr.bf16.gmra.mxu0 %v606
        %v642 = vpop.f32.mrf.mxu0
        %v643 = vadd.f32 %v482, %v642
        %v644 = vpop.f32.mrf.mxu0
        %v645 = vadd.f32 %v484, %v644
        %v646 = vpop.f32.mrf.mxu0
        %v647 = vadd.f32 %v486, %v646
        %v648 = vpop.f32.mrf.mxu0
        %v649 = vadd.f32 %v488, %v648
        %650 = vmatprep.mubr.bf16.mxu0 0
        %651 = vmatmul.mubr.bf16.gmra.mxu0 %v424
        %v652 = vpop.f32.mrf.mxu0
        %v653 = vadd.f32 %v492, %v652
        %v654 = vpop.f32.mrf.mxu0
        %v655 = vadd.f32 %v494, %v654
        %v656 = vpop.f32.mrf.mxu0
        %v657 = vadd.f32 %v496, %v656
        %v658 = vpop.f32.mrf.mxu0
        %v659 = vadd.f32 %v498, %v658
        %660 = vmatprep.mubr.bf16.mxu0 0
        %661 = vmatmul.mubr.bf16.gmra.mxu0 %v427
        %v662 = vpop.f32.mrf.mxu0
        %v663 = vadd.f32 %v502, %v662
        %v664 = vpop.f32.mrf.mxu0
        %v665 = vadd.f32 %v504, %v664
        %v666 = vpop.f32.mrf.mxu0
        %v667 = vadd.f32 %v506, %v666
        %v668 = vpop.f32.mrf.mxu0
        %v669 = vadd.f32 %v508, %v668
        %670 = vmatprep.mubr.bf16.mxu0 0
        %671 = vmatmul.mubr.bf16.gmra.mxu0 %v430
        %v672 = vpop.f32.mrf.mxu0
        %v673 = vadd.f32 %v512, %v672
        %v674 = vpop.f32.mrf.mxu0
        %v675 = vadd.f32 %v514, %v674
        %v676 = vpop.f32.mrf.mxu0
        %v677 = vadd.f32 %v516, %v676
        %v678 = vpop.f32.mrf.mxu0
        %v679 = vadd.f32 %v518, %v678
        %680 = vmatprep.mubr.bf16.mxu0 0
        %681 = vmatmul.mubr.bf16.gmra.mxu0 %v433
        %v682 = vpop.f32.mrf.mxu0
        %v683 = vadd.f32 %v522, %v682
        %v684 = vpop.f32.mrf.mxu0
        %v685 = vadd.f32 %v524, %v684
        %v686 = vpop.f32.mrf.mxu0
        %v687 = vadd.f32 %v526, %v686
        %v688 = vpop.f32.mrf.mxu0
        %v689 = vadd.f32 %v528, %v688
        %690 = vmatprep.mubr.bf16.mxu0 0
        %691 = vmatmul.mubr.bf16.gmra.mxu0 %v436
        %v692 = vpop.f32.mrf.mxu0
        %v693 = vadd.f32 %v532, %v692
        %v694 = vpop.f32.mrf.mxu0
        %v695 = vadd.f32 %v534, %v694
        %v696 = vpop.f32.mrf.mxu0
        %v697 = vadd.f32 %v536, %v696
        %v698 = vpop.f32.mrf.mxu0
        %v699 = vadd.f32 %v538, %v698
        %700 = vmatprep.mubr.bf16.mxu0 0
        %701 = vmatmul.mubr.bf16.gmra.mxu0 %v439
        %v702 = vpop.f32.mrf.mxu0
        %v703 = vadd.f32 %v542, %v702
        %v704 = vpop.f32.mrf.mxu0
        %v705 = vadd.f32 %v544, %v704
        %v706 = vpop.f32.mrf.mxu0
        %v707 = vadd.f32 %v546, %v706
        %v708 = vpop.f32.mrf.mxu0
        %v709 = vadd.f32 %v548, %v708
        %710 = vmatprep.mubr.bf16.mxu0 0
        %711 = vmatmul.mubr.bf16.gmra.mxu0 %v442
        %v712 = vpop.f32.mrf.mxu0
        %v713 = vadd.f32 %v552, %v712
        %v714 = vpop.f32.mrf.mxu0
        %v715 = vadd.f32 %v554, %v714
        %v716 = vpop.f32.mrf.mxu0
        %v717 = vadd.f32 %v556, %v716
        %v718 = vpop.f32.mrf.mxu0
        %v719 = vadd.f32 %v558, %v718
        %720 = vdwg.mxu0
        %v721 = vld [vmem:[%s283 + $0x10] sm:$0xf]
        %v722 = vld [vmem:[%s283 + $0x14] sm:$0xf]
        %v723 = vld [vmem:[%s283 + $0x18] sm:$0xf]
        %v724 = vld [vmem:[%s283 + $0x1c] sm:$0xf]
        %v725 = vld [vmem:[%s283 + $0x20] sm:$0xf]
        %v726 = vld [vmem:[%s283 + $0x24] sm:$0xf]
        %v727 = vld [vmem:[%s283 + $0x28] sm:$0xf]
        %v728 = vld [vmem:[%s283 + $0x2c] sm:$0xf]
        %v729 = vld [vmem:[%s283 + $0x30] sm:$0xf]
        %v730 = vld [vmem:[%s283 + $0x34] sm:$0xf]
        %v731 = vld [vmem:[%s283 + $0x38] sm:$0xf]
        %v732 = vld [vmem:[%s283 + $0x3c] sm:$0xf]
        %v733 = vld [vmem:[%s283 + $0x40] sm:$0xf]
        %v734 = vld [vmem:[%s283 + $0x44] sm:$0xf]
        %v735 = vld [vmem:[%s283 + $0x48] sm:$0xf]
        %v736 = vld [vmem:[%s283 + $0x4c] sm:$0xf]
        %s737 = scalar_lea.vmem %s3, 128
        %v738 = vld [vmem:[%s737] sm:$0xff]
        %v739 = vld [vmem:[%s737 + $0x8] sm:$0xff]
        %v740 = vld [vmem:[%s737 + $0x10] sm:$0xff]
        %v741 = vld [vmem:[%s737 + $0x18] sm:$0xff]
        %v742 = vld [vmem:[%s737 + $0x20] sm:$0xff]
        %v743 = vld [vmem:[%s737 + $0x28] sm:$0xff]
        %v744 = vld [vmem:[%s737 + $0x30] sm:$0xff]
        %v745 = vld [vmem:[%s737 + $0x38] sm:$0xff]
        %v762 = vunpack.c.l.b16 %v721
        %v763 = vunpack.c.l.b16 %v722
        %v764 = vunpack.c.l.b16 %v723
        %v765 = vunpack.c.l.b16 %v724
        %v766 = vunpack.c.l.b16 %v725
        %v767 = vunpack.c.l.b16 %v726
        %v768 = vunpack.c.l.b16 %v727
        %v769 = vunpack.c.l.b16 %v728
        %v770 = vunpack.c.l.b16 %v729
        %v771 = vunpack.c.l.b16 %v730
        %v772 = vunpack.c.l.b16 %v731
        %v773 = vunpack.c.l.b16 %v732
        %v774 = vunpack.c.l.b16 %v733
        %v775 = vunpack.c.l.b16 %v734
        %v776 = vunpack.c.l.b16 %v735
        %v777 = vunpack.c.l.b16 %v736
        %v778 = vpack.c.b16 %v763, %v762
        %v779 = vpack.c.b16 %v765, %v764
        %v780 = vpack.c.b16 %v767, %v766
        %v781 = vpack.c.b16 %v769, %v768
        %v782 = vpack.c.b16 %v771, %v770
        %v783 = vpack.c.b16 %v773, %v772
        %v784 = vpack.c.b16 %v775, %v774
        %v785 = vpack.c.b16 %v777, %v776
        %v794 = vunpack.c.l.b16 %v738
        %v795 = vunpack.c.h.b16 %v738
        %v796 = vunpack.c.l.b16 %v739
        %v797 = vunpack.c.h.b16 %v739
        %v798 = vunpack.c.l.b16 %v740
        %v799 = vunpack.c.h.b16 %v740
        %v800 = vunpack.c.l.b16 %v741
        %v801 = vunpack.c.h.b16 %v741
        %v802 = vunpack.c.l.b16 %v742
        %v803 = vunpack.c.h.b16 %v742
        %v804 = vunpack.c.l.b16 %v743
        %v805 = vunpack.c.h.b16 %v743
        %v806 = vunpack.c.l.b16 %v744
        %v807 = vunpack.c.h.b16 %v744
        %v808 = vunpack.c.l.b16 %v745
        %v809 = vunpack.c.h.b16 %v745
        %v810 = vpack.c.b16 %v796, %v794
        %v811 = vpack.c.b16 %v797, %v795
        %v812 = vpack.c.b16 %v800, %v798
        %v813 = vpack.c.b16 %v801, %v799
        %v814 = vpack.c.b16 %v804, %v802
        %v815 = vpack.c.b16 %v805, %v803
        %v816 = vpack.c.b16 %v808, %v806
        %v817 = vpack.c.b16 %v809, %v807
        %v827 = vsel %vm422, %v778, 0
        %v830 = vsel %vm422, %v779, 0
        %v833 = vsel %vm422, %v780, 0
        %v836 = vsel %vm422, %v781, 0
        %v839 = vsel %vm422, %v782, 0
        %v842 = vsel %vm422, %v783, 0
        %v845 = vsel %vm422, %v784, 0
        %v848 = vsel %vm422, %v785, 0
        %850 = vmatprep.subr.bf16.mxu0 0
        %851 = vmatpush1.bf16.msra.mxu0 0
        %852 = vmatprep.subr.bf16.mxu0 0
        %853 = vmatpush1.bf16.msra.mxu0 0
        %854 = vmatprep.subr.bf16.mxu0 0
        %855 = vmatpush1.bf16.msra.mxu0 0
        %856 = vmatprep.subr.bf16.mxu0 0
        %857 = vmatpush1.bf16.msra.mxu0 0
        %858 = vmatprep.subr.bf16.mxu0 %v817
        %859 = vmatpush1.bf16.msra.mxu0 %v816
        %860 = vmatprep.subr.bf16.mxu0 %v815
        %861 = vmatpush1.bf16.msra.mxu0 %v814
        %862 = vmatprep.subr.bf16.mxu0 %v813
        %863 = vmatpush1.bf16.msra.mxu0 %v812
        %864 = vmatprep.subr.bf16.mxu0 %v811
        %865 = vmatpush1.bf16.msra.mxu0 %v810
        %866 = vmatprep.subr.bf16.mxu0 0
        %867 = vmatpush2.bf16.msra.mxu0 0
        %868 = vmatprep.subr.bf16.mxu0 0
        %869 = vmatpush2.bf16.msra.mxu0 0
        %870 = vmatprep.subr.bf16.mxu0 0
        %871 = vmatpush2.bf16.msra.mxu0 0
        %872 = vmatprep.subr.bf16.mxu0 0
        %873 = vmatpush2.bf16.msra.mxu0 0
        %874 = vmatprep.subr.bf16.mxu0 0
        %875 = vmatpush2.bf16.msra.mxu0 0
        %876 = vmatprep.subr.bf16.mxu0 0
        %877 = vmatpush2.bf16.msra.mxu0 0
        %878 = vmatprep.subr.bf16.mxu0 0
        %879 = vmatpush2.bf16.msra.mxu0 0
        %880 = vmatprep.subr.bf16.mxu0 0
        %881 = vmatpush2.bf16.msra.mxu0 0
        %882 = vmatprep.mubr.bf16.mxu0 0
        %883 = vmatmul.mubr.bf16.gmra.mxu0 %v827
        %v884 = vpop.f32.mrf.mxu0
        %v885 = vadd.f32 0.0, %v884
        %v886 = vpop.f32.mrf.mxu0
        %v887 = vadd.f32 0.0, %v886
        %v888 = vpop.f32.mrf.mxu0
        %v889 = vadd.f32 0.0, %v888
        %v890 = vpop.f32.mrf.mxu0
        %v891 = vadd.f32 0.0, %v890
        %892 = vmatprep.mubr.bf16.mxu0 0
        %893 = vmatmul.mubr.bf16.gmra.mxu0 %v830
        %v894 = vpop.f32.mrf.mxu0
        %v895 = vadd.f32 0.0, %v894
        %v896 = vpop.f32.mrf.mxu0
        %v897 = vadd.f32 0.0, %v896
        %v898 = vpop.f32.mrf.mxu0
        %v899 = vadd.f32 0.0, %v898
        %v900 = vpop.f32.mrf.mxu0
        %v901 = vadd.f32 0.0, %v900
        %902 = vmatprep.mubr.bf16.mxu0 0
        %903 = vmatmul.mubr.bf16.gmra.mxu0 %v833
        %v904 = vpop.f32.mrf.mxu0
        %v905 = vadd.f32 0.0, %v904
        %v906 = vpop.f32.mrf.mxu0
        %v907 = vadd.f32 0.0, %v906
        %v908 = vpop.f32.mrf.mxu0
        %v909 = vadd.f32 0.0, %v908
        %v910 = vpop.f32.mrf.mxu0
        %v911 = vadd.f32 0.0, %v910
        %912 = vmatprep.mubr.bf16.mxu0 0
        %913 = vmatmul.mubr.bf16.gmra.mxu0 %v836
        %v914 = vpop.f32.mrf.mxu0
        %v915 = vadd.f32 0.0, %v914
        %v916 = vpop.f32.mrf.mxu0
        %v917 = vadd.f32 0.0, %v916
        %v918 = vpop.f32.mrf.mxu0
        %v919 = vadd.f32 0.0, %v918
        %v920 = vpop.f32.mrf.mxu0
        %v921 = vadd.f32 0.0, %v920
        %922 = vmatprep.mubr.bf16.mxu0 0
        %923 = vmatmul.mubr.bf16.gmra.mxu0 %v839
        %v924 = vpop.f32.mrf.mxu0
        %v925 = vadd.f32 0.0, %v924
        %v926 = vpop.f32.mrf.mxu0
        %v927 = vadd.f32 0.0, %v926
        %v928 = vpop.f32.mrf.mxu0
        %v929 = vadd.f32 0.0, %v928
        %v930 = vpop.f32.mrf.mxu0
        %v931 = vadd.f32 0.0, %v930
        %932 = vmatprep.mubr.bf16.mxu0 0
        %933 = vmatmul.mubr.bf16.gmra.mxu0 %v842
        %v934 = vpop.f32.mrf.mxu0
        %v935 = vadd.f32 0.0, %v934
        %v936 = vpop.f32.mrf.mxu0
        %v937 = vadd.f32 0.0, %v936
        %v938 = vpop.f32.mrf.mxu0
        %v939 = vadd.f32 0.0, %v938
        %v940 = vpop.f32.mrf.mxu0
        %v941 = vadd.f32 0.0, %v940
        %942 = vmatprep.mubr.bf16.mxu0 0
        %943 = vmatmul.mubr.bf16.gmra.mxu0 %v845
        %v944 = vpop.f32.mrf.mxu0
        %v945 = vadd.f32 0.0, %v944
        %v946 = vpop.f32.mrf.mxu0
        %v947 = vadd.f32 0.0, %v946
        %v948 = vpop.f32.mrf.mxu0
        %v949 = vadd.f32 0.0, %v948
        %v950 = vpop.f32.mrf.mxu0
        %v951 = vadd.f32 0.0, %v950
        %952 = vmatprep.mubr.bf16.mxu0 0
        %953 = vmatmul.mubr.bf16.gmra.mxu0 %v848
        %v954 = vpop.f32.mrf.mxu0
        %v955 = vadd.f32 0.0, %v954
        %v956 = vpop.f32.mrf.mxu0
        %v957 = vadd.f32 0.0, %v956
        %v958 = vpop.f32.mrf.mxu0
        %v959 = vadd.f32 0.0, %v958
        %v960 = vpop.f32.mrf.mxu0
        %v961 = vadd.f32 0.0, %v960
        %962 = vdwg.mxu0
        %v963 = vadd.f32 %v643, %v885
        %v964 = vadd.f32 %v645, %v887
        %v965 = vadd.f32 %v647, %v889
        %v966 = vadd.f32 %v649, %v891
        %v967 = vadd.f32 %v653, %v895
        %v968 = vadd.f32 %v655, %v897
        %v969 = vadd.f32 %v657, %v899
        %v970 = vadd.f32 %v659, %v901
        %v971 = vadd.f32 %v663, %v905
        %v972 = vadd.f32 %v665, %v907
        %v973 = vadd.f32 %v667, %v909
        %v974 = vadd.f32 %v669, %v911
        %v975 = vadd.f32 %v673, %v915
        %v976 = vadd.f32 %v675, %v917
        %v977 = vadd.f32 %v677, %v919
        %v978 = vadd.f32 %v679, %v921
        %v979 = vadd.f32 %v683, %v925
        %v980 = vadd.f32 %v685, %v927
        %v981 = vadd.f32 %v687, %v929
        %v982 = vadd.f32 %v689, %v931
        %v983 = vadd.f32 %v693, %v935
        %v984 = vadd.f32 %v695, %v937
        %v985 = vadd.f32 %v697, %v939
        %v986 = vadd.f32 %v699, %v941
        %v987 = vadd.f32 %v703, %v945
        %v988 = vadd.f32 %v705, %v947
        %v989 = vadd.f32 %v707, %v949
        %v990 = vadd.f32 %v709, %v951
        %v991 = vadd.f32 %v713, %v955
        %v992 = vadd.f32 %v715, %v957
        %v993 = vadd.f32 %v717, %v959
        %v994 = vadd.f32 %v719, %v961
        %v995 = vld [vmem:[%s293] sm:$0xf]
        %v996 = vld [vmem:[%s293 + $0x4] sm:$0xf]
        %v997 = vld [vmem:[%s293 + $0x8] sm:$0xf]
        %v998 = vld [vmem:[%s293 + $0xc] sm:$0xf]
        %v999 = vld [vmem:[%s293 + $0x10] sm:$0xf]
        %v1000 = vld [vmem:[%s293 + $0x14] sm:$0xf]
        %v1001 = vld [vmem:[%s293 + $0x18] sm:$0xf]
        %v1002 = vld [vmem:[%s293 + $0x1c] sm:$0xf]
        %v1003 = vld [vmem:[%s293 + $0x20] sm:$0xf]
        %v1004 = vld [vmem:[%s293 + $0x24] sm:$0xf]
        %v1005 = vld [vmem:[%s293 + $0x28] sm:$0xf]
        %v1006 = vld [vmem:[%s293 + $0x2c] sm:$0xf]
        %v1007 = vld [vmem:[%s293 + $0x30] sm:$0xf]
        %v1008 = vld [vmem:[%s293 + $0x34] sm:$0xf]
        %v1009 = vld [vmem:[%s293 + $0x38] sm:$0xf]
        %v1010 = vld [vmem:[%s293 + $0x3c] sm:$0xf]
        %s1011 = scalar_lea.vmem %s3, 192
        %v1012 = vld [vmem:[%s1011] sm:$0xff]
        %v1013 = vld [vmem:[%s1011 + $0x8] sm:$0xff]
        %v1014 = vld [vmem:[%s1011 + $0x10] sm:$0xff]
        %v1015 = vld [vmem:[%s1011 + $0x18] sm:$0xff]
        %v1016 = vld [vmem:[%s1011 + $0x20] sm:$0xff]
        %v1017 = vld [vmem:[%s1011 + $0x28] sm:$0xff]
        %v1018 = vld [vmem:[%s1011 + $0x30] sm:$0xff]
        %v1019 = vld [vmem:[%s1011 + $0x38] sm:$0xff]
        %v1036 = vunpack.c.l.b16 %v995
        %v1037 = vunpack.c.l.b16 %v996
        %v1038 = vunpack.c.l.b16 %v997
        %v1039 = vunpack.c.l.b16 %v998
        %v1040 = vunpack.c.l.b16 %v999
        %v1041 = vunpack.c.l.b16 %v1000
        %v1042 = vunpack.c.l.b16 %v1001
        %v1043 = vunpack.c.l.b16 %v1002
        %v1044 = vunpack.c.l.b16 %v1003
        %v1045 = vunpack.c.l.b16 %v1004
        %v1046 = vunpack.c.l.b16 %v1005
        %v1047 = vunpack.c.l.b16 %v1006
        %v1048 = vunpack.c.l.b16 %v1007
        %v1049 = vunpack.c.l.b16 %v1008
        %v1050 = vunpack.c.l.b16 %v1009
        %v1051 = vunpack.c.l.b16 %v1010
        %v1052 = vpack.c.b16 %v1037, %v1036
        %v1053 = vpack.c.b16 %v1039, %v1038
        %v1054 = vpack.c.b16 %v1041, %v1040
        %v1055 = vpack.c.b16 %v1043, %v1042
        %v1056 = vpack.c.b16 %v1045, %v1044
        %v1057 = vpack.c.b16 %v1047, %v1046
        %v1058 = vpack.c.b16 %v1049, %v1048
        %v1059 = vpack.c.b16 %v1051, %v1050
        %v1068 = vunpack.c.l.b16 %v1012
        %v1069 = vunpack.c.h.b16 %v1012
        %v1070 = vunpack.c.l.b16 %v1013
        %v1071 = vunpack.c.h.b16 %v1013
        %v1072 = vunpack.c.l.b16 %v1014
        %v1073 = vunpack.c.h.b16 %v1014
        %v1074 = vunpack.c.l.b16 %v1015
        %v1075 = vunpack.c.h.b16 %v1015
        %v1076 = vunpack.c.l.b16 %v1016
        %v1077 = vunpack.c.h.b16 %v1016
        %v1078 = vunpack.c.l.b16 %v1017
        %v1079 = vunpack.c.h.b16 %v1017
        %v1080 = vunpack.c.l.b16 %v1018
        %v1081 = vunpack.c.h.b16 %v1018
        %v1082 = vunpack.c.l.b16 %v1019
        %v1083 = vunpack.c.h.b16 %v1019
        %v1084 = vpack.c.b16 %v1070, %v1068
        %v1085 = vpack.c.b16 %v1071, %v1069
        %v1086 = vpack.c.b16 %v1074, %v1072
        %v1087 = vpack.c.b16 %v1075, %v1073
        %v1088 = vpack.c.b16 %v1078, %v1076
        %v1089 = vpack.c.b16 %v1079, %v1077
        %v1090 = vpack.c.b16 %v1082, %v1080
        %v1091 = vpack.c.b16 %v1083, %v1081
        %v1101 = vsel %vm422, %v1052, 0
        %v1104 = vsel %vm422, %v1053, 0
        %v1107 = vsel %vm422, %v1054, 0
        %v1110 = vsel %vm422, %v1055, 0
        %v1113 = vsel %vm422, %v1056, 0
        %v1116 = vsel %vm422, %v1057, 0
        %v1119 = vsel %vm422, %v1058, 0
        %v1122 = vsel %vm422, %v1059, 0
        %1124 = vmatprep.subr.bf16.mxu0 0
        %1125 = vmatpush1.bf16.msra.mxu0 0
        %1126 = vmatprep.subr.bf16.mxu0 0
        %1127 = vmatpush1.bf16.msra.mxu0 0
        %1128 = vmatprep.subr.bf16.mxu0 0
        %1129 = vmatpush1.bf16.msra.mxu0 0
        %1130 = vmatprep.subr.bf16.mxu0 0
        %1131 = vmatpush1.bf16.msra.mxu0 0
        %1132 = vmatprep.subr.bf16.mxu0 %v1091
        %1133 = vmatpush1.bf16.msra.mxu0 %v1090
        %1134 = vmatprep.subr.bf16.mxu0 %v1089
        %1135 = vmatpush1.bf16.msra.mxu0 %v1088
        %1136 = vmatprep.subr.bf16.mxu0 %v1087
        %1137 = vmatpush1.bf16.msra.mxu0 %v1086
        %1138 = vmatprep.subr.bf16.mxu0 %v1085
        %1139 = vmatpush1.bf16.msra.mxu0 %v1084
        %1140 = vmatprep.subr.bf16.mxu0 0
        %1141 = vmatpush2.bf16.msra.mxu0 0
        %1142 = vmatprep.subr.bf16.mxu0 0
        %1143 = vmatpush2.bf16.msra.mxu0 0
        %1144 = vmatprep.subr.bf16.mxu0 0
        %1145 = vmatpush2.bf16.msra.mxu0 0
        %1146 = vmatprep.subr.bf16.mxu0 0
        %1147 = vmatpush2.bf16.msra.mxu0 0
        %1148 = vmatprep.subr.bf16.mxu0 0
        %1149 = vmatpush2.bf16.msra.mxu0 0
        %1150 = vmatprep.subr.bf16.mxu0 0
        %1151 = vmatpush2.bf16.msra.mxu0 0
        %1152 = vmatprep.subr.bf16.mxu0 0
        %1153 = vmatpush2.bf16.msra.mxu0 0
        %1154 = vmatprep.subr.bf16.mxu0 0
        %1155 = vmatpush2.bf16.msra.mxu0 0
        %1156 = vmatprep.mubr.bf16.mxu0 0
        %1157 = vmatmul.mubr.bf16.gmra.mxu0 %v1101
        %v1158 = vpop.f32.mrf.mxu0
        %v1159 = vadd.f32 0.0, %v1158
        %v1160 = vpop.f32.mrf.mxu0
        %v1161 = vadd.f32 0.0, %v1160
        %v1162 = vpop.f32.mrf.mxu0
        %v1163 = vadd.f32 0.0, %v1162
        %v1164 = vpop.f32.mrf.mxu0
        %v1165 = vadd.f32 0.0, %v1164
        %1166 = vmatprep.mubr.bf16.mxu0 0
        %1167 = vmatmul.mubr.bf16.gmra.mxu0 %v1104
        %v1168 = vpop.f32.mrf.mxu0
        %v1169 = vadd.f32 0.0, %v1168
        %v1170 = vpop.f32.mrf.mxu0
        %v1171 = vadd.f32 0.0, %v1170
        %v1172 = vpop.f32.mrf.mxu0
        %v1173 = vadd.f32 0.0, %v1172
        %v1174 = vpop.f32.mrf.mxu0
        %v1175 = vadd.f32 0.0, %v1174
        %1176 = vmatprep.mubr.bf16.mxu0 0
        %1177 = vmatmul.mubr.bf16.gmra.mxu0 %v1107
        %v1178 = vpop.f32.mrf.mxu0
        %v1179 = vadd.f32 0.0, %v1178
        %v1180 = vpop.f32.mrf.mxu0
        %v1181 = vadd.f32 0.0, %v1180
        %v1182 = vpop.f32.mrf.mxu0
        %v1183 = vadd.f32 0.0, %v1182
        %v1184 = vpop.f32.mrf.mxu0
        %v1185 = vadd.f32 0.0, %v1184
        %1186 = vmatprep.mubr.bf16.mxu0 0
        %1187 = vmatmul.mubr.bf16.gmra.mxu0 %v1110
        %v1188 = vpop.f32.mrf.mxu0
        %v1189 = vadd.f32 0.0, %v1188
        %v1190 = vpop.f32.mrf.mxu0
        %v1191 = vadd.f32 0.0, %v1190
        %v1192 = vpop.f32.mrf.mxu0
        %v1193 = vadd.f32 0.0, %v1192
        %v1194 = vpop.f32.mrf.mxu0
        %v1195 = vadd.f32 0.0, %v1194
        %1196 = vmatprep.mubr.bf16.mxu0 0
        %1197 = vmatmul.mubr.bf16.gmra.mxu0 %v1113
        %v1198 = vpop.f32.mrf.mxu0
        %v1199 = vadd.f32 0.0, %v1198
        %v1200 = vpop.f32.mrf.mxu0
        %v1201 = vadd.f32 0.0, %v1200
        %v1202 = vpop.f32.mrf.mxu0
        %v1203 = vadd.f32 0.0, %v1202
        %v1204 = vpop.f32.mrf.mxu0
        %v1205 = vadd.f32 0.0, %v1204
        %1206 = vmatprep.mubr.bf16.mxu0 0
        %1207 = vmatmul.mubr.bf16.gmra.mxu0 %v1116
        %v1208 = vpop.f32.mrf.mxu0
        %v1209 = vadd.f32 0.0, %v1208
        %v1210 = vpop.f32.mrf.mxu0
        %v1211 = vadd.f32 0.0, %v1210
        %v1212 = vpop.f32.mrf.mxu0
        %v1213 = vadd.f32 0.0, %v1212
        %v1214 = vpop.f32.mrf.mxu0
        %v1215 = vadd.f32 0.0, %v1214
        %1216 = vmatprep.mubr.bf16.mxu0 0
        %1217 = vmatmul.mubr.bf16.gmra.mxu0 %v1119
        %v1218 = vpop.f32.mrf.mxu0
        %v1219 = vadd.f32 0.0, %v1218
        %v1220 = vpop.f32.mrf.mxu0
        %v1221 = vadd.f32 0.0, %v1220
        %v1222 = vpop.f32.mrf.mxu0
        %v1223 = vadd.f32 0.0, %v1222
        %v1224 = vpop.f32.mrf.mxu0
        %v1225 = vadd.f32 0.0, %v1224
        %1226 = vmatprep.mubr.bf16.mxu0 0
        %1227 = vmatmul.mubr.bf16.gmra.mxu0 %v1122
        %v1228 = vpop.f32.mrf.mxu0
        %v1229 = vadd.f32 0.0, %v1228
        %v1230 = vpop.f32.mrf.mxu0
        %v1231 = vadd.f32 0.0, %v1230
        %v1232 = vpop.f32.mrf.mxu0
        %v1233 = vadd.f32 0.0, %v1232
        %v1234 = vpop.f32.mrf.mxu0
        %v1235 = vadd.f32 0.0, %v1234
        %1236 = vdwg.mxu0
        %v1237 = vadd.f32 %v963, %v1159
        %v1238 = vadd.f32 %v964, %v1161
        %v1239 = vadd.f32 %v965, %v1163
        %v1240 = vadd.f32 %v966, %v1165
        %v1241 = vadd.f32 %v967, %v1169
        %v1242 = vadd.f32 %v968, %v1171
        %v1243 = vadd.f32 %v969, %v1173
        %v1244 = vadd.f32 %v970, %v1175
        %v1245 = vadd.f32 %v971, %v1179
        %v1246 = vadd.f32 %v972, %v1181
        %v1247 = vadd.f32 %v973, %v1183
        %v1248 = vadd.f32 %v974, %v1185
        %v1249 = vadd.f32 %v975, %v1189
        %v1250 = vadd.f32 %v976, %v1191
        %v1251 = vadd.f32 %v977, %v1193
        %v1252 = vadd.f32 %v978, %v1195
        %v1253 = vadd.f32 %v979, %v1199
        %v1254 = vadd.f32 %v980, %v1201
        %v1255 = vadd.f32 %v981, %v1203
        %v1256 = vadd.f32 %v982, %v1205
        %v1257 = vadd.f32 %v983, %v1209
        %v1258 = vadd.f32 %v984, %v1211
        %v1259 = vadd.f32 %v985, %v1213
        %v1260 = vadd.f32 %v986, %v1215
        %v1261 = vadd.f32 %v987, %v1219
        %v1262 = vadd.f32 %v988, %v1221
        %v1263 = vadd.f32 %v989, %v1223
        %v1264 = vadd.f32 %v990, %v1225
        %v1265 = vadd.f32 %v991, %v1229
        %v1266 = vadd.f32 %v992, %v1231
        %v1267 = vadd.f32 %v993, %v1233
        %v1268 = vadd.f32 %v994, %v1235
        %v1269 = vld [vmem:[%s293 + $0x8] sm:$0xf]
        %v1270 = vld [vmem:[%s293 + $0xc] sm:$0xf]
        %v1271 = vld [vmem:[%s293 + $0x10] sm:$0xf]
        %v1272 = vld [vmem:[%s293 + $0x14] sm:$0xf]
        %v1273 = vld [vmem:[%s293 + $0x18] sm:$0xf]
        %v1274 = vld [vmem:[%s293 + $0x1c] sm:$0xf]
        %v1275 = vld [vmem:[%s293 + $0x20] sm:$0xf]
        %v1276 = vld [vmem:[%s293 + $0x24] sm:$0xf]
        %v1277 = vld [vmem:[%s293 + $0x28] sm:$0xf]
        %v1278 = vld [vmem:[%s293 + $0x2c] sm:$0xf]
        %v1279 = vld [vmem:[%s293 + $0x30] sm:$0xf]
        %v1280 = vld [vmem:[%s293 + $0x34] sm:$0xf]
        %v1281 = vld [vmem:[%s293 + $0x38] sm:$0xf]
        %v1282 = vld [vmem:[%s293 + $0x3c] sm:$0xf]
        %v1283 = vld [vmem:[%s293 + $0x40] sm:$0xf]
        %v1284 = vld [vmem:[%s293 + $0x44] sm:$0xf]
        %s1285 = scalar_lea.vmem %s3, 256
        %v1286 = vld [vmem:[%s1285] sm:$0xff]
        %v1287 = vld [vmem:[%s1285 + $0x8] sm:$0xff]
        %v1288 = vld [vmem:[%s1285 + $0x10] sm:$0xff]
        %v1289 = vld [vmem:[%s1285 + $0x18] sm:$0xff]
        %v1290 = vld [vmem:[%s1285 + $0x20] sm:$0xff]
        %v1291 = vld [vmem:[%s1285 + $0x28] sm:$0xff]
        %v1292 = vld [vmem:[%s1285 + $0x30] sm:$0xff]
        %v1293 = vld [vmem:[%s1285 + $0x38] sm:$0xff]
        %v1310 = vunpack.c.l.b16 %v1269
        %v1311 = vunpack.c.l.b16 %v1270
        %v1312 = vunpack.c.l.b16 %v1271
        %v1313 = vunpack.c.l.b16 %v1272
        %v1314 = vunpack.c.l.b16 %v1273
        %v1315 = vunpack.c.l.b16 %v1274
        %v1316 = vunpack.c.l.b16 %v1275
        %v1317 = vunpack.c.l.b16 %v1276
        %v1318 = vunpack.c.l.b16 %v1277
        %v1319 = vunpack.c.l.b16 %v1278
        %v1320 = vunpack.c.l.b16 %v1279
        %v1321 = vunpack.c.l.b16 %v1280
        %v1322 = vunpack.c.l.b16 %v1281
        %v1323 = vunpack.c.l.b16 %v1282
        %v1324 = vunpack.c.l.b16 %v1283
        %v1325 = vunpack.c.l.b16 %v1284
        %v1326 = vpack.c.b16 %v1311, %v1310
        %v1327 = vpack.c.b16 %v1313, %v1312
        %v1328 = vpack.c.b16 %v1315, %v1314
        %v1329 = vpack.c.b16 %v1317, %v1316
        %v1330 = vpack.c.b16 %v1319, %v1318
        %v1331 = vpack.c.b16 %v1321, %v1320
        %v1332 = vpack.c.b16 %v1323, %v1322
        %v1333 = vpack.c.b16 %v1325, %v1324
        %v1342 = vunpack.c.l.b16 %v1286
        %v1343 = vunpack.c.h.b16 %v1286
        %v1344 = vunpack.c.l.b16 %v1287
        %v1345 = vunpack.c.h.b16 %v1287
        %v1346 = vunpack.c.l.b16 %v1288
        %v1347 = vunpack.c.h.b16 %v1288
        %v1348 = vunpack.c.l.b16 %v1289
        %v1349 = vunpack.c.h.b16 %v1289
        %v1350 = vunpack.c.l.b16 %v1290
        %v1351 = vunpack.c.h.b16 %v1290
        %v1352 = vunpack.c.l.b16 %v1291
        %v1353 = vunpack.c.h.b16 %v1291
        %v1354 = vunpack.c.l.b16 %v1292
        %v1355 = vunpack.c.h.b16 %v1292
        %v1356 = vunpack.c.l.b16 %v1293
        %v1357 = vunpack.c.h.b16 %v1293
        %v1358 = vpack.c.b16 %v1344, %v1342
        %v1359 = vpack.c.b16 %v1345, %v1343
        %v1360 = vpack.c.b16 %v1348, %v1346
        %v1361 = vpack.c.b16 %v1349, %v1347
        %v1362 = vpack.c.b16 %v1352, %v1350
        %v1363 = vpack.c.b16 %v1353, %v1351
        %v1364 = vpack.c.b16 %v1356, %v1354
        %v1365 = vpack.c.b16 %v1357, %v1355
        %v1375 = vsel %vm422, %v1326, 0
        %v1378 = vsel %vm422, %v1327, 0
        %v1381 = vsel %vm422, %v1328, 0
        %v1384 = vsel %vm422, %v1329, 0
        %v1387 = vsel %vm422, %v1330, 0
        %v1390 = vsel %vm422, %v1331, 0
        %v1393 = vsel %vm422, %v1332, 0
        %v1396 = vsel %vm422, %v1333, 0
        %1398 = vmatprep.subr.bf16.mxu0 0
        %1399 = vmatpush1.bf16.msra.mxu0 0
        %1400 = vmatprep.subr.bf16.mxu0 0
        %1401 = vmatpush1.bf16.msra.mxu0 0
        %1402 = vmatprep.subr.bf16.mxu0 0
        %1403 = vmatpush1.bf16.msra.mxu0 0
        %1404 = vmatprep.subr.bf16.mxu0 0
        %1405 = vmatpush1.bf16.msra.mxu0 0
        %1406 = vmatprep.subr.bf16.mxu0 %v1365
        %1407 = vmatpush1.bf16.msra.mxu0 %v1364
        %1408 = vmatprep.subr.bf16.mxu0 %v1363
        %1409 = vmatpush1.bf16.msra.mxu0 %v1362
        %1410 = vmatprep.subr.bf16.mxu0 %v1361
        %1411 = vmatpush1.bf16.msra.mxu0 %v1360
        %1412 = vmatprep.subr.bf16.mxu0 %v1359
        %1413 = vmatpush1.bf16.msra.mxu0 %v1358
        %1414 = vmatprep.subr.bf16.mxu0 0
        %1415 = vmatpush2.bf16.msra.mxu0 0
        %1416 = vmatprep.subr.bf16.mxu0 0
        %1417 = vmatpush2.bf16.msra.mxu0 0
        %1418 = vmatprep.subr.bf16.mxu0 0
        %1419 = vmatpush2.bf16.msra.mxu0 0
        %1420 = vmatprep.subr.bf16.mxu0 0
        %1421 = vmatpush2.bf16.msra.mxu0 0
        %1422 = vmatprep.subr.bf16.mxu0 0
        %1423 = vmatpush2.bf16.msra.mxu0 0
        %1424 = vmatprep.subr.bf16.mxu0 0
        %1425 = vmatpush2.bf16.msra.mxu0 0
        %1426 = vmatprep.subr.bf16.mxu0 0
        %1427 = vmatpush2.bf16.msra.mxu0 0
        %1428 = vmatprep.subr.bf16.mxu0 0
        %1429 = vmatpush2.bf16.msra.mxu0 0
        %1430 = vmatprep.mubr.bf16.mxu0 0
        %1431 = vmatmul.mubr.bf16.gmra.mxu0 %v1375
        %v1432 = vpop.f32.mrf.mxu0
        %v1433 = vadd.f32 0.0, %v1432
        %v1434 = vpop.f32.mrf.mxu0
        %v1435 = vadd.f32 0.0, %v1434
        %v1436 = vpop.f32.mrf.mxu0
        %v1437 = vadd.f32 0.0, %v1436
        %v1438 = vpop.f32.mrf.mxu0
        %v1439 = vadd.f32 0.0, %v1438
        %1440 = vmatprep.mubr.bf16.mxu0 0
        %1441 = vmatmul.mubr.bf16.gmra.mxu0 %v1378
        %v1442 = vpop.f32.mrf.mxu0
        %v1443 = vadd.f32 0.0, %v1442
        %v1444 = vpop.f32.mrf.mxu0
        %v1445 = vadd.f32 0.0, %v1444
        %v1446 = vpop.f32.mrf.mxu0
        %v1447 = vadd.f32 0.0, %v1446
        %v1448 = vpop.f32.mrf.mxu0
        %v1449 = vadd.f32 0.0, %v1448
        %1450 = vmatprep.mubr.bf16.mxu0 0
        %1451 = vmatmul.mubr.bf16.gmra.mxu0 %v1381
        %v1452 = vpop.f32.mrf.mxu0
        %v1453 = vadd.f32 0.0, %v1452
        %v1454 = vpop.f32.mrf.mxu0
        %v1455 = vadd.f32 0.0, %v1454
        %v1456 = vpop.f32.mrf.mxu0
        %v1457 = vadd.f32 0.0, %v1456
        %v1458 = vpop.f32.mrf.mxu0
        %v1459 = vadd.f32 0.0, %v1458
        %1460 = vmatprep.mubr.bf16.mxu0 0
        %1461 = vmatmul.mubr.bf16.gmra.mxu0 %v1384
        %v1462 = vpop.f32.mrf.mxu0
        %v1463 = vadd.f32 0.0, %v1462
        %v1464 = vpop.f32.mrf.mxu0
        %v1465 = vadd.f32 0.0, %v1464
        %v1466 = vpop.f32.mrf.mxu0
        %v1467 = vadd.f32 0.0, %v1466
        %v1468 = vpop.f32.mrf.mxu0
        %v1469 = vadd.f32 0.0, %v1468
        %1470 = vmatprep.mubr.bf16.mxu0 0
        %1471 = vmatmul.mubr.bf16.gmra.mxu0 %v1387
        %v1472 = vpop.f32.mrf.mxu0
        %v1473 = vadd.f32 0.0, %v1472
        %v1474 = vpop.f32.mrf.mxu0
        %v1475 = vadd.f32 0.0, %v1474
        %v1476 = vpop.f32.mrf.mxu0
        %v1477 = vadd.f32 0.0, %v1476
        %v1478 = vpop.f32.mrf.mxu0
        %v1479 = vadd.f32 0.0, %v1478
        %1480 = vmatprep.mubr.bf16.mxu0 0
        %1481 = vmatmul.mubr.bf16.gmra.mxu0 %v1390
        %v1482 = vpop.f32.mrf.mxu0
        %v1483 = vadd.f32 0.0, %v1482
        %v1484 = vpop.f32.mrf.mxu0
        %v1485 = vadd.f32 0.0, %v1484
        %v1486 = vpop.f32.mrf.mxu0
        %v1487 = vadd.f32 0.0, %v1486
        %v1488 = vpop.f32.mrf.mxu0
        %v1489 = vadd.f32 0.0, %v1488
        %1490 = vmatprep.mubr.bf16.mxu0 0
        %1491 = vmatmul.mubr.bf16.gmra.mxu0 %v1393
        %v1492 = vpop.f32.mrf.mxu0
        %v1493 = vadd.f32 0.0, %v1492
        %v1494 = vpop.f32.mrf.mxu0
        %v1495 = vadd.f32 0.0, %v1494
        %v1496 = vpop.f32.mrf.mxu0
        %v1497 = vadd.f32 0.0, %v1496
        %v1498 = vpop.f32.mrf.mxu0
        %v1499 = vadd.f32 0.0, %v1498
        %1500 = vmatprep.mubr.bf16.mxu0 0
        %1501 = vmatmul.mubr.bf16.gmra.mxu0 %v1396
        %v1502 = vpop.f32.mrf.mxu0
        %v1503 = vadd.f32 0.0, %v1502
        %v1504 = vpop.f32.mrf.mxu0
        %v1505 = vadd.f32 0.0, %v1504
        %v1506 = vpop.f32.mrf.mxu0
        %v1507 = vadd.f32 0.0, %v1506
        %v1508 = vpop.f32.mrf.mxu0
        %v1509 = vadd.f32 0.0, %v1508
        %1510 = vdwg.mxu0
        %v1511 = vadd.f32 %v1237, %v1433
        %v1512 = vadd.f32 %v1238, %v1435
        %v1513 = vadd.f32 %v1239, %v1437
        %v1514 = vadd.f32 %v1240, %v1439
        %v1515 = vadd.f32 %v1241, %v1443
        %v1516 = vadd.f32 %v1242, %v1445
        %v1517 = vadd.f32 %v1243, %v1447
        %v1518 = vadd.f32 %v1244, %v1449
        %v1519 = vadd.f32 %v1245, %v1453
        %v1520 = vadd.f32 %v1246, %v1455
        %v1521 = vadd.f32 %v1247, %v1457
        %v1522 = vadd.f32 %v1248, %v1459
        %v1523 = vadd.f32 %v1249, %v1463
        %v1524 = vadd.f32 %v1250, %v1465
        %v1525 = vadd.f32 %v1251, %v1467
        %v1526 = vadd.f32 %v1252, %v1469
        %v1527 = vadd.f32 %v1253, %v1473
        %v1528 = vadd.f32 %v1254, %v1475
        %v1529 = vadd.f32 %v1255, %v1477
        %v1530 = vadd.f32 %v1256, %v1479
        %v1531 = vadd.f32 %v1257, %v1483
        %v1532 = vadd.f32 %v1258, %v1485
        %v1533 = vadd.f32 %v1259, %v1487
        %v1534 = vadd.f32 %v1260, %v1489
        %v1535 = vadd.f32 %v1261, %v1493
        %v1536 = vadd.f32 %v1262, %v1495
        %v1537 = vadd.f32 %v1263, %v1497
        %v1538 = vadd.f32 %v1264, %v1499
        %v1539 = vadd.f32 %v1265, %v1503
        %v1540 = vadd.f32 %v1266, %v1505
        %v1541 = vadd.f32 %v1267, %v1507
        %v1542 = vadd.f32 %v1268, %v1509
        %v1543 = vld [vmem:[%s293 + $0x10] sm:$0xf]
        %v1544 = vld [vmem:[%s293 + $0x14] sm:$0xf]
        %v1545 = vld [vmem:[%s293 + $0x18] sm:$0xf]
        %v1546 = vld [vmem:[%s293 + $0x1c] sm:$0xf]
        %v1547 = vld [vmem:[%s293 + $0x20] sm:$0xf]
        %v1548 = vld [vmem:[%s293 + $0x24] sm:$0xf]
        %v1549 = vld [vmem:[%s293 + $0x28] sm:$0xf]
        %v1550 = vld [vmem:[%s293 + $0x2c] sm:$0xf]
        %v1551 = vld [vmem:[%s293 + $0x30] sm:$0xf]
        %v1552 = vld [vmem:[%s293 + $0x34] sm:$0xf]
        %v1553 = vld [vmem:[%s293 + $0x38] sm:$0xf]
        %v1554 = vld [vmem:[%s293 + $0x3c] sm:$0xf]
        %v1555 = vld [vmem:[%s293 + $0x40] sm:$0xf]
        %v1556 = vld [vmem:[%s293 + $0x44] sm:$0xf]
        %v1557 = vld [vmem:[%s293 + $0x48] sm:$0xf]
        %v1558 = vld [vmem:[%s293 + $0x4c] sm:$0xf]
        %s1559 = scalar_lea.vmem %s3, 320
        %v1560 = vld [vmem:[%s1559] sm:$0xff]
        %v1561 = vld [vmem:[%s1559 + $0x8] sm:$0xff]
        %v1562 = vld [vmem:[%s1559 + $0x10] sm:$0xff]
        %v1563 = vld [vmem:[%s1559 + $0x18] sm:$0xff]
        %v1564 = vld [vmem:[%s1559 + $0x20] sm:$0xff]
        %v1565 = vld [vmem:[%s1559 + $0x28] sm:$0xff]
        %v1566 = vld [vmem:[%s1559 + $0x30] sm:$0xff]
        %v1567 = vld [vmem:[%s1559 + $0x38] sm:$0xff]
        %v1584 = vunpack.c.l.b16 %v1543
        %v1585 = vunpack.c.l.b16 %v1544
        %v1586 = vunpack.c.l.b16 %v1545
        %v1587 = vunpack.c.l.b16 %v1546
        %v1588 = vunpack.c.l.b16 %v1547
        %v1589 = vunpack.c.l.b16 %v1548
        %v1590 = vunpack.c.l.b16 %v1549
        %v1591 = vunpack.c.l.b16 %v1550
        %v1592 = vunpack.c.l.b16 %v1551
        %v1593 = vunpack.c.l.b16 %v1552
        %v1594 = vunpack.c.l.b16 %v1553
        %v1595 = vunpack.c.l.b16 %v1554
        %v1596 = vunpack.c.l.b16 %v1555
        %v1597 = vunpack.c.l.b16 %v1556
        %v1598 = vunpack.c.l.b16 %v1557
        %v1599 = vunpack.c.l.b16 %v1558
        %v1600 = vpack.c.b16 %v1585, %v1584
        %v1601 = vpack.c.b16 %v1587, %v1586
        %v1602 = vpack.c.b16 %v1589, %v1588
        %v1603 = vpack.c.b16 %v1591, %v1590
        %v1604 = vpack.c.b16 %v1593, %v1592
        %v1605 = vpack.c.b16 %v1595, %v1594
        %v1606 = vpack.c.b16 %v1597, %v1596
        %v1607 = vpack.c.b16 %v1599, %v1598
        %v1616 = vunpack.c.l.b16 %v1560
        %v1617 = vunpack.c.h.b16 %v1560
        %v1618 = vunpack.c.l.b16 %v1561
        %v1619 = vunpack.c.h.b16 %v1561
        %v1620 = vunpack.c.l.b16 %v1562
        %v1621 = vunpack.c.h.b16 %v1562
        %v1622 = vunpack.c.l.b16 %v1563
        %v1623 = vunpack.c.h.b16 %v1563
        %v1624 = vunpack.c.l.b16 %v1564
        %v1625 = vunpack.c.h.b16 %v1564
        %v1626 = vunpack.c.l.b16 %v1565
        %v1627 = vunpack.c.h.b16 %v1565
        %v1628 = vunpack.c.l.b16 %v1566
        %v1629 = vunpack.c.h.b16 %v1566
        %v1630 = vunpack.c.l.b16 %v1567
        %v1631 = vunpack.c.h.b16 %v1567
        %v1632 = vpack.c.b16 %v1618, %v1616
        %v1633 = vpack.c.b16 %v1619, %v1617
        %v1634 = vpack.c.b16 %v1622, %v1620
        %v1635 = vpack.c.b16 %v1623, %v1621
        %v1636 = vpack.c.b16 %v1626, %v1624
        %v1637 = vpack.c.b16 %v1627, %v1625
        %v1638 = vpack.c.b16 %v1630, %v1628
        %v1639 = vpack.c.b16 %v1631, %v1629
        %v1649 = vsel %vm422, %v1600, 0
        %v1652 = vsel %vm422, %v1601, 0
        %v1655 = vsel %vm422, %v1602, 0
        %v1658 = vsel %vm422, %v1603, 0
        %v1661 = vsel %vm422, %v1604, 0
        %v1664 = vsel %vm422, %v1605, 0
        %v1667 = vsel %vm422, %v1606, 0
        %v1670 = vsel %vm422, %v1607, 0
        %1672 = vmatprep.subr.bf16.mxu0 0
        %1673 = vmatpush1.bf16.msra.mxu0 0
        %1674 = vmatprep.subr.bf16.mxu0 0
        %1675 = vmatpush1.bf16.msra.mxu0 0
        %1676 = vmatprep.subr.bf16.mxu0 0
        %1677 = vmatpush1.bf16.msra.mxu0 0
        %1678 = vmatprep.subr.bf16.mxu0 0
        %1679 = vmatpush1.bf16.msra.mxu0 0
        %1680 = vmatprep.subr.bf16.mxu0 %v1639
        %1681 = vmatpush1.bf16.msra.mxu0 %v1638
        %1682 = vmatprep.subr.bf16.mxu0 %v1637
        %1683 = vmatpush1.bf16.msra.mxu0 %v1636
        %1684 = vmatprep.subr.bf16.mxu0 %v1635
        %1685 = vmatpush1.bf16.msra.mxu0 %v1634
        %1686 = vmatprep.subr.bf16.mxu0 %v1633
        %1687 = vmatpush1.bf16.msra.mxu0 %v1632
        %1688 = vmatprep.subr.bf16.mxu0 0
        %1689 = vmatpush2.bf16.msra.mxu0 0
        %1690 = vmatprep.subr.bf16.mxu0 0
        %1691 = vmatpush2.bf16.msra.mxu0 0
        %1692 = vmatprep.subr.bf16.mxu0 0
        %1693 = vmatpush2.bf16.msra.mxu0 0
        %1694 = vmatprep.subr.bf16.mxu0 0
        %1695 = vmatpush2.bf16.msra.mxu0 0
        %1696 = vmatprep.subr.bf16.mxu0 0
        %1697 = vmatpush2.bf16.msra.mxu0 0
        %1698 = vmatprep.subr.bf16.mxu0 0
        %1699 = vmatpush2.bf16.msra.mxu0 0
        %1700 = vmatprep.subr.bf16.mxu0 0
        %1701 = vmatpush2.bf16.msra.mxu0 0
        %1702 = vmatprep.subr.bf16.mxu0 0
        %1703 = vmatpush2.bf16.msra.mxu0 0
        %1704 = vmatprep.mubr.bf16.mxu0 0
        %1705 = vmatmul.mubr.bf16.gmra.mxu0 %v1649
        %v1706 = vpop.f32.mrf.mxu0
        %v1707 = vadd.f32 0.0, %v1706
        %v1708 = vpop.f32.mrf.mxu0
        %v1709 = vadd.f32 0.0, %v1708
        %v1710 = vpop.f32.mrf.mxu0
        %v1711 = vadd.f32 0.0, %v1710
        %v1712 = vpop.f32.mrf.mxu0
        %v1713 = vadd.f32 0.0, %v1712
        %1714 = vmatprep.mubr.bf16.mxu0 0
        %1715 = vmatmul.mubr.bf16.gmra.mxu0 %v1652
        %v1716 = vpop.f32.mrf.mxu0
        %v1717 = vadd.f32 0.0, %v1716
        %v1718 = vpop.f32.mrf.mxu0
        %v1719 = vadd.f32 0.0, %v1718
        %v1720 = vpop.f32.mrf.mxu0
        %v1721 = vadd.f32 0.0, %v1720
        %v1722 = vpop.f32.mrf.mxu0
        %v1723 = vadd.f32 0.0, %v1722
        %1724 = vmatprep.mubr.bf16.mxu0 0
        %1725 = vmatmul.mubr.bf16.gmra.mxu0 %v1655
        %v1726 = vpop.f32.mrf.mxu0
        %v1727 = vadd.f32 0.0, %v1726
        %v1728 = vpop.f32.mrf.mxu0
        %v1729 = vadd.f32 0.0, %v1728
        %v1730 = vpop.f32.mrf.mxu0
        %v1731 = vadd.f32 0.0, %v1730
        %v1732 = vpop.f32.mrf.mxu0
        %v1733 = vadd.f32 0.0, %v1732
        %1734 = vmatprep.mubr.bf16.mxu0 0
        %1735 = vmatmul.mubr.bf16.gmra.mxu0 %v1658
        %v1736 = vpop.f32.mrf.mxu0
        %v1737 = vadd.f32 0.0, %v1736
        %v1738 = vpop.f32.mrf.mxu0
        %v1739 = vadd.f32 0.0, %v1738
        %v1740 = vpop.f32.mrf.mxu0
        %v1741 = vadd.f32 0.0, %v1740
        %v1742 = vpop.f32.mrf.mxu0
        %v1743 = vadd.f32 0.0, %v1742
        %1744 = vmatprep.mubr.bf16.mxu0 0
        %1745 = vmatmul.mubr.bf16.gmra.mxu0 %v1661
        %v1746 = vpop.f32.mrf.mxu0
        %v1747 = vadd.f32 0.0, %v1746
        %v1748 = vpop.f32.mrf.mxu0
        %v1749 = vadd.f32 0.0, %v1748
        %v1750 = vpop.f32.mrf.mxu0
        %v1751 = vadd.f32 0.0, %v1750
        %v1752 = vpop.f32.mrf.mxu0
        %v1753 = vadd.f32 0.0, %v1752
        %1754 = vmatprep.mubr.bf16.mxu0 0
        %1755 = vmatmul.mubr.bf16.gmra.mxu0 %v1664
        %v1756 = vpop.f32.mrf.mxu0
        %v1757 = vadd.f32 0.0, %v1756
        %v1758 = vpop.f32.mrf.mxu0
        %v1759 = vadd.f32 0.0, %v1758
        %v1760 = vpop.f32.mrf.mxu0
        %v1761 = vadd.f32 0.0, %v1760
        %v1762 = vpop.f32.mrf.mxu0
        %v1763 = vadd.f32 0.0, %v1762
        %1764 = vmatprep.mubr.bf16.mxu0 0
        %1765 = vmatmul.mubr.bf16.gmra.mxu0 %v1667
        %v1766 = vpop.f32.mrf.mxu0
        %v1767 = vadd.f32 0.0, %v1766
        %v1768 = vpop.f32.mrf.mxu0
        %v1769 = vadd.f32 0.0, %v1768
        %v1770 = vpop.f32.mrf.mxu0
        %v1771 = vadd.f32 0.0, %v1770
        %v1772 = vpop.f32.mrf.mxu0
        %v1773 = vadd.f32 0.0, %v1772
        %1774 = vmatprep.mubr.bf16.mxu0 0
        %1775 = vmatmul.mubr.bf16.gmra.mxu0 %v1670
        %v1776 = vpop.f32.mrf.mxu0
        %v1777 = vadd.f32 0.0, %v1776
        %v1778 = vpop.f32.mrf.mxu0
        %v1779 = vadd.f32 0.0, %v1778
        %v1780 = vpop.f32.mrf.mxu0
        %v1781 = vadd.f32 0.0, %v1780
        %v1782 = vpop.f32.mrf.mxu0
        %v1783 = vadd.f32 0.0, %v1782
        %1784 = vdwg.mxu0
        %v1785 = vadd.f32 %v1511, %v1707
        %v1786 = vadd.f32 %v1512, %v1709
        %v1787 = vadd.f32 %v1513, %v1711
        %v1788 = vadd.f32 %v1514, %v1713
        %v1789 = vadd.f32 %v1515, %v1717
        %v1790 = vadd.f32 %v1516, %v1719
        %v1791 = vadd.f32 %v1517, %v1721
        %v1792 = vadd.f32 %v1518, %v1723
        %v1793 = vadd.f32 %v1519, %v1727
        %v1794 = vadd.f32 %v1520, %v1729
        %v1795 = vadd.f32 %v1521, %v1731
        %v1796 = vadd.f32 %v1522, %v1733
        %v1797 = vadd.f32 %v1523, %v1737
        %v1798 = vadd.f32 %v1524, %v1739
        %v1799 = vadd.f32 %v1525, %v1741
        %v1800 = vadd.f32 %v1526, %v1743
        %v1801 = vadd.f32 %v1527, %v1747
        %v1802 = vadd.f32 %v1528, %v1749
        %v1803 = vadd.f32 %v1529, %v1751
        %v1804 = vadd.f32 %v1530, %v1753
        %v1805 = vadd.f32 %v1531, %v1757
        %v1806 = vadd.f32 %v1532, %v1759
        %v1807 = vadd.f32 %v1533, %v1761
        %v1808 = vadd.f32 %v1534, %v1763
        %v1809 = vadd.f32 %v1535, %v1767
        %v1810 = vadd.f32 %v1536, %v1769
        %v1811 = vadd.f32 %v1537, %v1771
        %v1812 = vadd.f32 %v1538, %v1773
        %v1813 = vadd.f32 %v1539, %v1777
        %v1814 = vadd.f32 %v1540, %v1779
        %v1815 = vadd.f32 %v1541, %v1781
        %v1816 = vadd.f32 %v1542, %v1783
        %v1817 = vld [vmem:[%s304] sm:$0xf]
        %v1818 = vld [vmem:[%s304 + $0x4] sm:$0xf]
        %v1819 = vld [vmem:[%s304 + $0x8] sm:$0xf]
        %v1820 = vld [vmem:[%s304 + $0xc] sm:$0xf]
        %v1821 = vld [vmem:[%s304 + $0x10] sm:$0xf]
        %v1822 = vld [vmem:[%s304 + $0x14] sm:$0xf]
        %v1823 = vld [vmem:[%s304 + $0x18] sm:$0xf]
        %v1824 = vld [vmem:[%s304 + $0x1c] sm:$0xf]
        %v1825 = vld [vmem:[%s304 + $0x20] sm:$0xf]
        %v1826 = vld [vmem:[%s304 + $0x24] sm:$0xf]
        %v1827 = vld [vmem:[%s304 + $0x28] sm:$0xf]
        %v1828 = vld [vmem:[%s304 + $0x2c] sm:$0xf]
        %v1829 = vld [vmem:[%s304 + $0x30] sm:$0xf]
        %v1830 = vld [vmem:[%s304 + $0x34] sm:$0xf]
        %v1831 = vld [vmem:[%s304 + $0x38] sm:$0xf]
        %v1832 = vld [vmem:[%s304 + $0x3c] sm:$0xf]
        %s1833 = scalar_lea.vmem %s3, 384
        %v1834 = vld [vmem:[%s1833] sm:$0xff]
        %v1835 = vld [vmem:[%s1833 + $0x8] sm:$0xff]
        %v1836 = vld [vmem:[%s1833 + $0x10] sm:$0xff]
        %v1837 = vld [vmem:[%s1833 + $0x18] sm:$0xff]
        %v1838 = vld [vmem:[%s1833 + $0x20] sm:$0xff]
        %v1839 = vld [vmem:[%s1833 + $0x28] sm:$0xff]
        %v1840 = vld [vmem:[%s1833 + $0x30] sm:$0xff]
        %v1841 = vld [vmem:[%s1833 + $0x38] sm:$0xff]
        %v1858 = vunpack.c.l.b16 %v1817
        %v1859 = vunpack.c.l.b16 %v1818
        %v1860 = vunpack.c.l.b16 %v1819
        %v1861 = vunpack.c.l.b16 %v1820
        %v1862 = vunpack.c.l.b16 %v1821
        %v1863 = vunpack.c.l.b16 %v1822
        %v1864 = vunpack.c.l.b16 %v1823
        %v1865 = vunpack.c.l.b16 %v1824
        %v1866 = vunpack.c.l.b16 %v1825
        %v1867 = vunpack.c.l.b16 %v1826
        %v1868 = vunpack.c.l.b16 %v1827
        %v1869 = vunpack.c.l.b16 %v1828
        %v1870 = vunpack.c.l.b16 %v1829
        %v1871 = vunpack.c.l.b16 %v1830
        %v1872 = vunpack.c.l.b16 %v1831
        %v1873 = vunpack.c.l.b16 %v1832
        %v1874 = vpack.c.b16 %v1859, %v1858
        %v1875 = vpack.c.b16 %v1861, %v1860
        %v1876 = vpack.c.b16 %v1863, %v1862
        %v1877 = vpack.c.b16 %v1865, %v1864
        %v1878 = vpack.c.b16 %v1867, %v1866
        %v1879 = vpack.c.b16 %v1869, %v1868
        %v1880 = vpack.c.b16 %v1871, %v1870
        %v1881 = vpack.c.b16 %v1873, %v1872
        %v1890 = vunpack.c.l.b16 %v1834
        %v1891 = vunpack.c.h.b16 %v1834
        %v1892 = vunpack.c.l.b16 %v1835
        %v1893 = vunpack.c.h.b16 %v1835
        %v1894 = vunpack.c.l.b16 %v1836
        %v1895 = vunpack.c.h.b16 %v1836
        %v1896 = vunpack.c.l.b16 %v1837
        %v1897 = vunpack.c.h.b16 %v1837
        %v1898 = vunpack.c.l.b16 %v1838
        %v1899 = vunpack.c.h.b16 %v1838
        %v1900 = vunpack.c.l.b16 %v1839
        %v1901 = vunpack.c.h.b16 %v1839
        %v1902 = vunpack.c.l.b16 %v1840
        %v1903 = vunpack.c.h.b16 %v1840
        %v1904 = vunpack.c.l.b16 %v1841
        %v1905 = vunpack.c.h.b16 %v1841
        %v1906 = vpack.c.b16 %v1892, %v1890
        %v1907 = vpack.c.b16 %v1893, %v1891
        %v1908 = vpack.c.b16 %v1896, %v1894
        %v1909 = vpack.c.b16 %v1897, %v1895
        %v1910 = vpack.c.b16 %v1900, %v1898
        %v1911 = vpack.c.b16 %v1901, %v1899
        %v1912 = vpack.c.b16 %v1904, %v1902
        %v1913 = vpack.c.b16 %v1905, %v1903
        %v1923 = vsel %vm422, %v1874, 0
        %v1926 = vsel %vm422, %v1875, 0
        %v1929 = vsel %vm422, %v1876, 0
        %v1932 = vsel %vm422, %v1877, 0
        %v1935 = vsel %vm422, %v1878, 0
        %v1938 = vsel %vm422, %v1879, 0
        %v1941 = vsel %vm422, %v1880, 0
        %v1944 = vsel %vm422, %v1881, 0
        %1946 = vmatprep.subr.bf16.mxu0 0
        %1947 = vmatpush1.bf16.msra.mxu0 0
        %1948 = vmatprep.subr.bf16.mxu0 0
        %1949 = vmatpush1.bf16.msra.mxu0 0
        %1950 = vmatprep.subr.bf16.mxu0 0
        %1951 = vmatpush1.bf16.msra.mxu0 0
        %1952 = vmatprep.subr.bf16.mxu0 0
        %1953 = vmatpush1.bf16.msra.mxu0 0
        %1954 = vmatprep.subr.bf16.mxu0 %v1913
        %1955 = vmatpush1.bf16.msra.mxu0 %v1912
        %1956 = vmatprep.subr.bf16.mxu0 %v1911
        %1957 = vmatpush1.bf16.msra.mxu0 %v1910
        %1958 = vmatprep.subr.bf16.mxu0 %v1909
        %1959 = vmatpush1.bf16.msra.mxu0 %v1908
        %1960 = vmatprep.subr.bf16.mxu0 %v1907
        %1961 = vmatpush1.bf16.msra.mxu0 %v1906
        %1962 = vmatprep.subr.bf16.mxu0 0
        %1963 = vmatpush2.bf16.msra.mxu0 0
        %1964 = vmatprep.subr.bf16.mxu0 0
        %1965 = vmatpush2.bf16.msra.mxu0 0
        %1966 = vmatprep.subr.bf16.mxu0 0
        %1967 = vmatpush2.bf16.msra.mxu0 0
        %1968 = vmatprep.subr.bf16.mxu0 0
        %1969 = vmatpush2.bf16.msra.mxu0 0
        %1970 = vmatprep.subr.bf16.mxu0 0
        %1971 = vmatpush2.bf16.msra.mxu0 0
        %1972 = vmatprep.subr.bf16.mxu0 0
        %1973 = vmatpush2.bf16.msra.mxu0 0
        %1974 = vmatprep.subr.bf16.mxu0 0
        %1975 = vmatpush2.bf16.msra.mxu0 0
        %1976 = vmatprep.subr.bf16.mxu0 0
        %1977 = vmatpush2.bf16.msra.mxu0 0
        %1978 = vmatprep.mubr.bf16.mxu0 0
        %1979 = vmatmul.mubr.bf16.gmra.mxu0 %v1923
        %v1980 = vpop.f32.mrf.mxu0
        %v1981 = vadd.f32 0.0, %v1980
        %v1982 = vpop.f32.mrf.mxu0
        %v1983 = vadd.f32 0.0, %v1982
        %v1984 = vpop.f32.mrf.mxu0
        %v1985 = vadd.f32 0.0, %v1984
        %v1986 = vpop.f32.mrf.mxu0
        %v1987 = vadd.f32 0.0, %v1986
        %1988 = vmatprep.mubr.bf16.mxu0 0
        %1989 = vmatmul.mubr.bf16.gmra.mxu0 %v1926
        %v1990 = vpop.f32.mrf.mxu0
        %v1991 = vadd.f32 0.0, %v1990
        %v1992 = vpop.f32.mrf.mxu0
        %v1993 = vadd.f32 0.0, %v1992
        %v1994 = vpop.f32.mrf.mxu0
        %v1995 = vadd.f32 0.0, %v1994
        %v1996 = vpop.f32.mrf.mxu0
        %v1997 = vadd.f32 0.0, %v1996
        %1998 = vmatprep.mubr.bf16.mxu0 0
        %1999 = vmatmul.mubr.bf16.gmra.mxu0 %v1929
        %v2000 = vpop.f32.mrf.mxu0
        %v2001 = vadd.f32 0.0, %v2000
        %v2002 = vpop.f32.mrf.mxu0
        %v2003 = vadd.f32 0.0, %v2002
        %v2004 = vpop.f32.mrf.mxu0
        %v2005 = vadd.f32 0.0, %v2004
        %v2006 = vpop.f32.mrf.mxu0
        %v2007 = vadd.f32 0.0, %v2006
        %2008 = vmatprep.mubr.bf16.mxu0 0
        %2009 = vmatmul.mubr.bf16.gmra.mxu0 %v1932
        %v2010 = vpop.f32.mrf.mxu0
        %v2011 = vadd.f32 0.0, %v2010
        %v2012 = vpop.f32.mrf.mxu0
        %v2013 = vadd.f32 0.0, %v2012
        %v2014 = vpop.f32.mrf.mxu0
        %v2015 = vadd.f32 0.0, %v2014
        %v2016 = vpop.f32.mrf.mxu0
        %v2017 = vadd.f32 0.0, %v2016
        %2018 = vmatprep.mubr.bf16.mxu0 0
        %2019 = vmatmul.mubr.bf16.gmra.mxu0 %v1935
        %v2020 = vpop.f32.mrf.mxu0
        %v2021 = vadd.f32 0.0, %v2020
        %v2022 = vpop.f32.mrf.mxu0
        %v2023 = vadd.f32 0.0, %v2022
        %v2024 = vpop.f32.mrf.mxu0
        %v2025 = vadd.f32 0.0, %v2024
        %v2026 = vpop.f32.mrf.mxu0
        %v2027 = vadd.f32 0.0, %v2026
        %2028 = vmatprep.mubr.bf16.mxu0 0
        %2029 = vmatmul.mubr.bf16.gmra.mxu0 %v1938
        %v2030 = vpop.f32.mrf.mxu0
        %v2031 = vadd.f32 0.0, %v2030
        %v2032 = vpop.f32.mrf.mxu0
        %v2033 = vadd.f32 0.0, %v2032
        %v2034 = vpop.f32.mrf.mxu0
        %v2035 = vadd.f32 0.0, %v2034
        %v2036 = vpop.f32.mrf.mxu0
        %v2037 = vadd.f32 0.0, %v2036
        %2038 = vmatprep.mubr.bf16.mxu0 0
        %2039 = vmatmul.mubr.bf16.gmra.mxu0 %v1941
        %v2040 = vpop.f32.mrf.mxu0
        %v2041 = vadd.f32 0.0, %v2040
        %v2042 = vpop.f32.mrf.mxu0
        %v2043 = vadd.f32 0.0, %v2042
        %v2044 = vpop.f32.mrf.mxu0
        %v2045 = vadd.f32 0.0, %v2044
        %v2046 = vpop.f32.mrf.mxu0
        %v2047 = vadd.f32 0.0, %v2046
        %2048 = vmatprep.mubr.bf16.mxu0 0
        %2049 = vmatmul.mubr.bf16.gmra.mxu0 %v1944
        %v2050 = vpop.f32.mrf.mxu0
        %v2051 = vadd.f32 0.0, %v2050
        %v2052 = vpop.f32.mrf.mxu0
        %v2053 = vadd.f32 0.0, %v2052
        %v2054 = vpop.f32.mrf.mxu0
        %v2055 = vadd.f32 0.0, %v2054
        %v2056 = vpop.f32.mrf.mxu0
        %v2057 = vadd.f32 0.0, %v2056
        %2058 = vdwg.mxu0
        %v2059 = vadd.f32 %v1785, %v1981
        %v2060 = vadd.f32 %v1786, %v1983
        %v2061 = vadd.f32 %v1787, %v1985
        %v2062 = vadd.f32 %v1788, %v1987
        %v2063 = vadd.f32 %v1789, %v1991
        %v2064 = vadd.f32 %v1790, %v1993
        %v2065 = vadd.f32 %v1791, %v1995
        %v2066 = vadd.f32 %v1792, %v1997
        %v2067 = vadd.f32 %v1793, %v2001
        %v2068 = vadd.f32 %v1794, %v2003
        %v2069 = vadd.f32 %v1795, %v2005
        %v2070 = vadd.f32 %v1796, %v2007
        %v2071 = vadd.f32 %v1797, %v2011
        %v2072 = vadd.f32 %v1798, %v2013
        %v2073 = vadd.f32 %v1799, %v2015
        %v2074 = vadd.f32 %v1800, %v2017
        %v2075 = vadd.f32 %v1801, %v2021
        %v2076 = vadd.f32 %v1802, %v2023
        %v2077 = vadd.f32 %v1803, %v2025
        %v2078 = vadd.f32 %v1804, %v2027
        %v2079 = vadd.f32 %v1805, %v2031
        %v2080 = vadd.f32 %v1806, %v2033
        %v2081 = vadd.f32 %v1807, %v2035
        %v2082 = vadd.f32 %v1808, %v2037
        %v2083 = vadd.f32 %v1809, %v2041
        %v2084 = vadd.f32 %v1810, %v2043
        %v2085 = vadd.f32 %v1811, %v2045
        %v2086 = vadd.f32 %v1812, %v2047
        %v2087 = vadd.f32 %v1813, %v2051
        %v2088 = vadd.f32 %v1814, %v2053
        %v2089 = vadd.f32 %v1815, %v2055
        %v2090 = vadd.f32 %v1816, %v2057
        %v2091 = vld [vmem:[%s304 + $0x8] sm:$0xf]
        %v2092 = vld [vmem:[%s304 + $0xc] sm:$0xf]
        %v2093 = vld [vmem:[%s304 + $0x10] sm:$0xf]
        %v2094 = vld [vmem:[%s304 + $0x14] sm:$0xf]
        %v2095 = vld [vmem:[%s304 + $0x18] sm:$0xf]
        %v2096 = vld [vmem:[%s304 + $0x1c] sm:$0xf]
        %v2097 = vld [vmem:[%s304 + $0x20] sm:$0xf]
        %v2098 = vld [vmem:[%s304 + $0x24] sm:$0xf]
        %v2099 = vld [vmem:[%s304 + $0x28] sm:$0xf]
        %v2100 = vld [vmem:[%s304 + $0x2c] sm:$0xf]
        %v2101 = vld [vmem:[%s304 + $0x30] sm:$0xf]
        %v2102 = vld [vmem:[%s304 + $0x34] sm:$0xf]
        %v2103 = vld [vmem:[%s304 + $0x38] sm:$0xf]
        %v2104 = vld [vmem:[%s304 + $0x3c] sm:$0xf]
        %v2105 = vld [vmem:[%s304 + $0x40] sm:$0xf]
        %v2106 = vld [vmem:[%s304 + $0x44] sm:$0xf]
        %s2107 = scalar_lea.vmem %s3, 448
        %v2108 = vld [vmem:[%s2107] sm:$0xff]
        %v2109 = vld [vmem:[%s2107 + $0x8] sm:$0xff]
        %v2110 = vld [vmem:[%s2107 + $0x10] sm:$0xff]
        %v2111 = vld [vmem:[%s2107 + $0x18] sm:$0xff]
        %v2112 = vld [vmem:[%s2107 + $0x20] sm:$0xff]
        %v2113 = vld [vmem:[%s2107 + $0x28] sm:$0xff]
        %v2114 = vld [vmem:[%s2107 + $0x30] sm:$0xff]
        %v2115 = vld [vmem:[%s2107 + $0x38] sm:$0xff]
        %v2132 = vunpack.c.l.b16 %v2091
        %v2133 = vunpack.c.l.b16 %v2092
        %v2134 = vunpack.c.l.b16 %v2093
        %v2135 = vunpack.c.l.b16 %v2094
        %v2136 = vunpack.c.l.b16 %v2095
        %v2137 = vunpack.c.l.b16 %v2096
        %v2138 = vunpack.c.l.b16 %v2097
        %v2139 = vunpack.c.l.b16 %v2098
        %v2140 = vunpack.c.l.b16 %v2099
        %v2141 = vunpack.c.l.b16 %v2100
        %v2142 = vunpack.c.l.b16 %v2101
        %v2143 = vunpack.c.l.b16 %v2102
        %v2144 = vunpack.c.l.b16 %v2103
        %v2145 = vunpack.c.l.b16 %v2104
        %v2146 = vunpack.c.l.b16 %v2105
        %v2147 = vunpack.c.l.b16 %v2106
        %v2148 = vpack.c.b16 %v2133, %v2132
        %v2149 = vpack.c.b16 %v2135, %v2134
        %v2150 = vpack.c.b16 %v2137, %v2136
        %v2151 = vpack.c.b16 %v2139, %v2138
        %v2152 = vpack.c.b16 %v2141, %v2140
        %v2153 = vpack.c.b16 %v2143, %v2142
        %v2154 = vpack.c.b16 %v2145, %v2144
        %v2155 = vpack.c.b16 %v2147, %v2146
        %v2164 = vunpack.c.l.b16 %v2108
        %v2165 = vunpack.c.h.b16 %v2108
        %v2166 = vunpack.c.l.b16 %v2109
        %v2167 = vunpack.c.h.b16 %v2109
        %v2168 = vunpack.c.l.b16 %v2110
        %v2169 = vunpack.c.h.b16 %v2110
        %v2170 = vunpack.c.l.b16 %v2111
        %v2171 = vunpack.c.h.b16 %v2111
        %v2172 = vunpack.c.l.b16 %v2112
        %v2173 = vunpack.c.h.b16 %v2112
        %v2174 = vunpack.c.l.b16 %v2113
        %v2175 = vunpack.c.h.b16 %v2113
        %v2176 = vunpack.c.l.b16 %v2114
        %v2177 = vunpack.c.h.b16 %v2114
        %v2178 = vunpack.c.l.b16 %v2115
        %v2179 = vunpack.c.h.b16 %v2115
        %v2180 = vpack.c.b16 %v2166, %v2164
        %v2181 = vpack.c.b16 %v2167, %v2165
        %v2182 = vpack.c.b16 %v2170, %v2168
        %v2183 = vpack.c.b16 %v2171, %v2169
        %v2184 = vpack.c.b16 %v2174, %v2172
        %v2185 = vpack.c.b16 %v2175, %v2173
        %v2186 = vpack.c.b16 %v2178, %v2176
        %v2187 = vpack.c.b16 %v2179, %v2177
        %v2197 = vsel %vm422, %v2148, 0
        %v2200 = vsel %vm422, %v2149, 0
        %v2203 = vsel %vm422, %v2150, 0
        %v2206 = vsel %vm422, %v2151, 0
        %v2209 = vsel %vm422, %v2152, 0
        %v2212 = vsel %vm422, %v2153, 0
        %v2215 = vsel %vm422, %v2154, 0
        %v2218 = vsel %vm422, %v2155, 0
        %2220 = vmatprep.subr.bf16.mxu0 0
        %2221 = vmatpush1.bf16.msra.mxu0 0
        %2222 = vmatprep.subr.bf16.mxu0 0
        %2223 = vmatpush1.bf16.msra.mxu0 0
        %2224 = vmatprep.subr.bf16.mxu0 0
        %2225 = vmatpush1.bf16.msra.mxu0 0
        %2226 = vmatprep.subr.bf16.mxu0 0
        %2227 = vmatpush1.bf16.msra.mxu0 0
        %2228 = vmatprep.subr.bf16.mxu0 %v2187
        %2229 = vmatpush1.bf16.msra.mxu0 %v2186
        %2230 = vmatprep.subr.bf16.mxu0 %v2185
        %2231 = vmatpush1.bf16.msra.mxu0 %v2184
        %2232 = vmatprep.subr.bf16.mxu0 %v2183
        %2233 = vmatpush1.bf16.msra.mxu0 %v2182
        %2234 = vmatprep.subr.bf16.mxu0 %v2181
        %2235 = vmatpush1.bf16.msra.mxu0 %v2180
        %2236 = vmatprep.subr.bf16.mxu0 0
        %2237 = vmatpush2.bf16.msra.mxu0 0
        %2238 = vmatprep.subr.bf16.mxu0 0
        %2239 = vmatpush2.bf16.msra.mxu0 0
        %2240 = vmatprep.subr.bf16.mxu0 0
        %2241 = vmatpush2.bf16.msra.mxu0 0
        %2242 = vmatprep.subr.bf16.mxu0 0
        %2243 = vmatpush2.bf16.msra.mxu0 0
        %2244 = vmatprep.subr.bf16.mxu0 0
        %2245 = vmatpush2.bf16.msra.mxu0 0
        %2246 = vmatprep.subr.bf16.mxu0 0
        %2247 = vmatpush2.bf16.msra.mxu0 0
        %2248 = vmatprep.subr.bf16.mxu0 0
        %2249 = vmatpush2.bf16.msra.mxu0 0
        %2250 = vmatprep.subr.bf16.mxu0 0
        %2251 = vmatpush2.bf16.msra.mxu0 0
        %2252 = vmatprep.mubr.bf16.mxu0 0
        %2253 = vmatmul.mubr.bf16.gmra.mxu0 %v2197
        %v2254 = vpop.f32.mrf.mxu0
        %v2255 = vadd.f32 0.0, %v2254
        %v2256 = vpop.f32.mrf.mxu0
        %v2257 = vadd.f32 0.0, %v2256
        %v2258 = vpop.f32.mrf.mxu0
        %v2259 = vadd.f32 0.0, %v2258
        %v2260 = vpop.f32.mrf.mxu0
        %v2261 = vadd.f32 0.0, %v2260
        %2262 = vmatprep.mubr.bf16.mxu0 0
        %2263 = vmatmul.mubr.bf16.gmra.mxu0 %v2200
        %v2264 = vpop.f32.mrf.mxu0
        %v2265 = vadd.f32 0.0, %v2264
        %v2266 = vpop.f32.mrf.mxu0
        %v2267 = vadd.f32 0.0, %v2266
        %v2268 = vpop.f32.mrf.mxu0
        %v2269 = vadd.f32 0.0, %v2268
        %v2270 = vpop.f32.mrf.mxu0
        %v2271 = vadd.f32 0.0, %v2270
        %2272 = vmatprep.mubr.bf16.mxu0 0
        %2273 = vmatmul.mubr.bf16.gmra.mxu0 %v2203
        %v2274 = vpop.f32.mrf.mxu0
        %v2275 = vadd.f32 0.0, %v2274
        %v2276 = vpop.f32.mrf.mxu0
        %v2277 = vadd.f32 0.0, %v2276
        %v2278 = vpop.f32.mrf.mxu0
        %v2279 = vadd.f32 0.0, %v2278
        %v2280 = vpop.f32.mrf.mxu0
        %v2281 = vadd.f32 0.0, %v2280
        %2282 = vmatprep.mubr.bf16.mxu0 0
        %2283 = vmatmul.mubr.bf16.gmra.mxu0 %v2206
        %v2284 = vpop.f32.mrf.mxu0
        %v2285 = vadd.f32 0.0, %v2284
        %v2286 = vpop.f32.mrf.mxu0
        %v2287 = vadd.f32 0.0, %v2286
        %v2288 = vpop.f32.mrf.mxu0
        %v2289 = vadd.f32 0.0, %v2288
        %v2290 = vpop.f32.mrf.mxu0
        %v2291 = vadd.f32 0.0, %v2290
        %2292 = vmatprep.mubr.bf16.mxu0 0
        %2293 = vmatmul.mubr.bf16.gmra.mxu0 %v2209
        %v2294 = vpop.f32.mrf.mxu0
        %v2295 = vadd.f32 0.0, %v2294
        %v2296 = vpop.f32.mrf.mxu0
        %v2297 = vadd.f32 0.0, %v2296
        %v2298 = vpop.f32.mrf.mxu0
        %v2299 = vadd.f32 0.0, %v2298
        %v2300 = vpop.f32.mrf.mxu0
        %v2301 = vadd.f32 0.0, %v2300
        %2302 = vmatprep.mubr.bf16.mxu0 0
        %2303 = vmatmul.mubr.bf16.gmra.mxu0 %v2212
        %v2304 = vpop.f32.mrf.mxu0
        %v2305 = vadd.f32 0.0, %v2304
        %v2306 = vpop.f32.mrf.mxu0
        %v2307 = vadd.f32 0.0, %v2306
        %v2308 = vpop.f32.mrf.mxu0
        %v2309 = vadd.f32 0.0, %v2308
        %v2310 = vpop.f32.mrf.mxu0
        %v2311 = vadd.f32 0.0, %v2310
        %2312 = vmatprep.mubr.bf16.mxu0 0
        %2313 = vmatmul.mubr.bf16.gmra.mxu0 %v2215
        %v2314 = vpop.f32.mrf.mxu0
        %v2315 = vadd.f32 0.0, %v2314
        %v2316 = vpop.f32.mrf.mxu0
        %v2317 = vadd.f32 0.0, %v2316
        %v2318 = vpop.f32.mrf.mxu0
        %v2319 = vadd.f32 0.0, %v2318
        %v2320 = vpop.f32.mrf.mxu0
        %v2321 = vadd.f32 0.0, %v2320
        %2322 = vmatprep.mubr.bf16.mxu0 0
        %2323 = vmatmul.mubr.bf16.gmra.mxu0 %v2218
        %v2324 = vpop.f32.mrf.mxu0
        %v2325 = vadd.f32 0.0, %v2324
        %v2326 = vpop.f32.mrf.mxu0
        %v2327 = vadd.f32 0.0, %v2326
        %v2328 = vpop.f32.mrf.mxu0
        %v2329 = vadd.f32 0.0, %v2328
        %v2330 = vpop.f32.mrf.mxu0
        %v2331 = vadd.f32 0.0, %v2330
        %2332 = vdwg.mxu0
        %v2333 = vadd.f32 %v2059, %v2255
        %v2334 = vadd.f32 %v2060, %v2257
        %v2335 = vadd.f32 %v2061, %v2259
        %v2336 = vadd.f32 %v2062, %v2261
        %v2337 = vadd.f32 %v2063, %v2265
        %v2338 = vadd.f32 %v2064, %v2267
        %v2339 = vadd.f32 %v2065, %v2269
        %v2340 = vadd.f32 %v2066, %v2271
        %v2341 = vadd.f32 %v2067, %v2275
        %v2342 = vadd.f32 %v2068, %v2277
        %v2343 = vadd.f32 %v2069, %v2279
        %v2344 = vadd.f32 %v2070, %v2281
        %v2345 = vadd.f32 %v2071, %v2285
        %v2346 = vadd.f32 %v2072, %v2287
        %v2347 = vadd.f32 %v2073, %v2289
        %v2348 = vadd.f32 %v2074, %v2291
        %v2349 = vadd.f32 %v2075, %v2295
        %v2350 = vadd.f32 %v2076, %v2297
        %v2351 = vadd.f32 %v2077, %v2299
        %v2352 = vadd.f32 %v2078, %v2301
        %v2353 = vadd.f32 %v2079, %v2305
        %v2354 = vadd.f32 %v2080, %v2307
        %v2355 = vadd.f32 %v2081, %v2309
        %v2356 = vadd.f32 %v2082, %v2311
        %v2357 = vadd.f32 %v2083, %v2315
        %v2358 = vadd.f32 %v2084, %v2317
        %v2359 = vadd.f32 %v2085, %v2319
        %v2360 = vadd.f32 %v2086, %v2321
        %v2361 = vadd.f32 %v2087, %v2325
        %v2362 = vadd.f32 %v2088, %v2327
        %v2363 = vadd.f32 %v2089, %v2329
        %v2364 = vadd.f32 %v2090, %v2331
        %v2365 = vld [vmem:[%s304 + $0x10] sm:$0xf]
        %v2366 = vld [vmem:[%s304 + $0x14] sm:$0xf]
        %v2367 = vld [vmem:[%s304 + $0x18] sm:$0xf]
        %v2368 = vld [vmem:[%s304 + $0x1c] sm:$0xf]
        %v2369 = vld [vmem:[%s304 + $0x20] sm:$0xf]
        %v2370 = vld [vmem:[%s304 + $0x24] sm:$0xf]
        %v2371 = vld [vmem:[%s304 + $0x28] sm:$0xf]
        %v2372 = vld [vmem:[%s304 + $0x2c] sm:$0xf]
        %v2373 = vld [vmem:[%s304 + $0x30] sm:$0xf]
        %v2374 = vld [vmem:[%s304 + $0x34] sm:$0xf]
        %v2375 = vld [vmem:[%s304 + $0x38] sm:$0xf]
        %v2376 = vld [vmem:[%s304 + $0x3c] sm:$0xf]
        %v2377 = vld [vmem:[%s304 + $0x40] sm:$0xf]
        %v2378 = vld [vmem:[%s304 + $0x44] sm:$0xf]
        %v2379 = vld [vmem:[%s304 + $0x48] sm:$0xf]
        %v2380 = vld [vmem:[%s304 + $0x4c] sm:$0xf]
        %s2381 = scalar_lea.vmem %s3, 512
        %v2382 = vld [vmem:[%s2381] sm:$0xff]
        %v2383 = vld [vmem:[%s2381 + $0x8] sm:$0xff]
        %v2384 = vld [vmem:[%s2381 + $0x10] sm:$0xff]
        %v2385 = vld [vmem:[%s2381 + $0x18] sm:$0xff]
        %v2386 = vld [vmem:[%s2381 + $0x20] sm:$0xff]
        %v2387 = vld [vmem:[%s2381 + $0x28] sm:$0xff]
        %v2388 = vld [vmem:[%s2381 + $0x30] sm:$0xff]
        %v2389 = vld [vmem:[%s2381 + $0x38] sm:$0xff]
        %v2406 = vunpack.c.l.b16 %v2365
        %v2407 = vunpack.c.l.b16 %v2366
        %v2408 = vunpack.c.l.b16 %v2367
        %v2409 = vunpack.c.l.b16 %v2368
        %v2410 = vunpack.c.l.b16 %v2369
        %v2411 = vunpack.c.l.b16 %v2370
        %v2412 = vunpack.c.l.b16 %v2371
        %v2413 = vunpack.c.l.b16 %v2372
        %v2414 = vunpack.c.l.b16 %v2373
        %v2415 = vunpack.c.l.b16 %v2374
        %v2416 = vunpack.c.l.b16 %v2375
        %v2417 = vunpack.c.l.b16 %v2376
        %v2418 = vunpack.c.l.b16 %v2377
        %v2419 = vunpack.c.l.b16 %v2378
        %v2420 = vunpack.c.l.b16 %v2379
        %v2421 = vunpack.c.l.b16 %v2380
        %v2422 = vpack.c.b16 %v2407, %v2406
        %v2423 = vpack.c.b16 %v2409, %v2408
        %v2424 = vpack.c.b16 %v2411, %v2410
        %v2425 = vpack.c.b16 %v2413, %v2412
        %v2426 = vpack.c.b16 %v2415, %v2414
        %v2427 = vpack.c.b16 %v2417, %v2416
        %v2428 = vpack.c.b16 %v2419, %v2418
        %v2429 = vpack.c.b16 %v2421, %v2420
        %v2438 = vunpack.c.l.b16 %v2382
        %v2439 = vunpack.c.h.b16 %v2382
        %v2440 = vunpack.c.l.b16 %v2383
        %v2441 = vunpack.c.h.b16 %v2383
        %v2442 = vunpack.c.l.b16 %v2384
        %v2443 = vunpack.c.h.b16 %v2384
        %v2444 = vunpack.c.l.b16 %v2385
        %v2445 = vunpack.c.h.b16 %v2385
        %v2446 = vunpack.c.l.b16 %v2386
        %v2447 = vunpack.c.h.b16 %v2386
        %v2448 = vunpack.c.l.b16 %v2387
        %v2449 = vunpack.c.h.b16 %v2387
        %v2450 = vunpack.c.l.b16 %v2388
        %v2451 = vunpack.c.h.b16 %v2388
        %v2452 = vunpack.c.l.b16 %v2389
        %v2453 = vunpack.c.h.b16 %v2389
        %v2454 = vpack.c.b16 %v2440, %v2438
        %v2455 = vpack.c.b16 %v2441, %v2439
        %v2456 = vpack.c.b16 %v2444, %v2442
        %v2457 = vpack.c.b16 %v2445, %v2443
        %v2458 = vpack.c.b16 %v2448, %v2446
        %v2459 = vpack.c.b16 %v2449, %v2447
        %v2460 = vpack.c.b16 %v2452, %v2450
        %v2461 = vpack.c.b16 %v2453, %v2451
        %v2471 = vsel %vm422, %v2422, 0
        %v2474 = vsel %vm422, %v2423, 0
        %v2477 = vsel %vm422, %v2424, 0
        %v2480 = vsel %vm422, %v2425, 0
        %v2483 = vsel %vm422, %v2426, 0
        %v2486 = vsel %vm422, %v2427, 0
        %v2489 = vsel %vm422, %v2428, 0
        %v2492 = vsel %vm422, %v2429, 0
        %2494 = vmatprep.subr.bf16.mxu0 0
        %2495 = vmatpush1.bf16.msra.mxu0 0
        %2496 = vmatprep.subr.bf16.mxu0 0
        %2497 = vmatpush1.bf16.msra.mxu0 0
        %2498 = vmatprep.subr.bf16.mxu0 0
        %2499 = vmatpush1.bf16.msra.mxu0 0
        %2500 = vmatprep.subr.bf16.mxu0 0
        %2501 = vmatpush1.bf16.msra.mxu0 0
        %2502 = vmatprep.subr.bf16.mxu0 %v2461
        %2503 = vmatpush1.bf16.msra.mxu0 %v2460
        %2504 = vmatprep.subr.bf16.mxu0 %v2459
        %2505 = vmatpush1.bf16.msra.mxu0 %v2458
        %2506 = vmatprep.subr.bf16.mxu0 %v2457
        %2507 = vmatpush1.bf16.msra.mxu0 %v2456
        %2508 = vmatprep.subr.bf16.mxu0 %v2455
        %2509 = vmatpush1.bf16.msra.mxu0 %v2454
        %2510 = vmatprep.subr.bf16.mxu0 0
        %2511 = vmatpush2.bf16.msra.mxu0 0
        %2512 = vmatprep.subr.bf16.mxu0 0
        %2513 = vmatpush2.bf16.msra.mxu0 0
        %2514 = vmatprep.subr.bf16.mxu0 0
        %2515 = vmatpush2.bf16.msra.mxu0 0
        %2516 = vmatprep.subr.bf16.mxu0 0
        %2517 = vmatpush2.bf16.msra.mxu0 0
        %2518 = vmatprep.subr.bf16.mxu0 0
        %2519 = vmatpush2.bf16.msra.mxu0 0
        %2520 = vmatprep.subr.bf16.mxu0 0
        %2521 = vmatpush2.bf16.msra.mxu0 0
        %2522 = vmatprep.subr.bf16.mxu0 0
        %2523 = vmatpush2.bf16.msra.mxu0 0
        %2524 = vmatprep.subr.bf16.mxu0 0
        %2525 = vmatpush2.bf16.msra.mxu0 0
        %2526 = vmatprep.mubr.bf16.mxu0 0
        %2527 = vmatmul.mubr.bf16.gmra.mxu0 %v2471
        %v2528 = vpop.f32.mrf.mxu0
        %v2529 = vadd.f32 0.0, %v2528
        %v2530 = vpop.f32.mrf.mxu0
        %v2531 = vadd.f32 0.0, %v2530
        %v2532 = vpop.f32.mrf.mxu0
        %v2533 = vadd.f32 0.0, %v2532
        %v2534 = vpop.f32.mrf.mxu0
        %v2535 = vadd.f32 0.0, %v2534
        %2536 = vmatprep.mubr.bf16.mxu0 0
        %2537 = vmatmul.mubr.bf16.gmra.mxu0 %v2474
        %v2538 = vpop.f32.mrf.mxu0
        %v2539 = vadd.f32 0.0, %v2538
        %v2540 = vpop.f32.mrf.mxu0
        %v2541 = vadd.f32 0.0, %v2540
        %v2542 = vpop.f32.mrf.mxu0
        %v2543 = vadd.f32 0.0, %v2542
        %v2544 = vpop.f32.mrf.mxu0
        %v2545 = vadd.f32 0.0, %v2544
        %2546 = vmatprep.mubr.bf16.mxu0 0
        %2547 = vmatmul.mubr.bf16.gmra.mxu0 %v2477
        %v2548 = vpop.f32.mrf.mxu0
        %v2549 = vadd.f32 0.0, %v2548
        %v2550 = vpop.f32.mrf.mxu0
        %v2551 = vadd.f32 0.0, %v2550
        %v2552 = vpop.f32.mrf.mxu0
        %v2553 = vadd.f32 0.0, %v2552
        %v2554 = vpop.f32.mrf.mxu0
        %v2555 = vadd.f32 0.0, %v2554
        %2556 = vmatprep.mubr.bf16.mxu0 0
        %2557 = vmatmul.mubr.bf16.gmra.mxu0 %v2480
        %v2558 = vpop.f32.mrf.mxu0
        %v2559 = vadd.f32 0.0, %v2558
        %v2560 = vpop.f32.mrf.mxu0
        %v2561 = vadd.f32 0.0, %v2560
        %v2562 = vpop.f32.mrf.mxu0
        %v2563 = vadd.f32 0.0, %v2562
        %v2564 = vpop.f32.mrf.mxu0
        %v2565 = vadd.f32 0.0, %v2564
        %2566 = vmatprep.mubr.bf16.mxu0 0
        %2567 = vmatmul.mubr.bf16.gmra.mxu0 %v2483
        %v2568 = vpop.f32.mrf.mxu0
        %v2569 = vadd.f32 0.0, %v2568
        %v2570 = vpop.f32.mrf.mxu0
        %v2571 = vadd.f32 0.0, %v2570
        %v2572 = vpop.f32.mrf.mxu0
        %v2573 = vadd.f32 0.0, %v2572
        %v2574 = vpop.f32.mrf.mxu0
        %v2575 = vadd.f32 0.0, %v2574
        %2576 = vmatprep.mubr.bf16.mxu0 0
        %2577 = vmatmul.mubr.bf16.gmra.mxu0 %v2486
        %v2578 = vpop.f32.mrf.mxu0
        %v2579 = vadd.f32 0.0, %v2578
        %v2580 = vpop.f32.mrf.mxu0
        %v2581 = vadd.f32 0.0, %v2580
        %v2582 = vpop.f32.mrf.mxu0
        %v2583 = vadd.f32 0.0, %v2582
        %v2584 = vpop.f32.mrf.mxu0
        %v2585 = vadd.f32 0.0, %v2584
        %2586 = vmatprep.mubr.bf16.mxu0 0
        %2587 = vmatmul.mubr.bf16.gmra.mxu0 %v2489
        %v2588 = vpop.f32.mrf.mxu0
        %v2589 = vadd.f32 0.0, %v2588
        %v2590 = vpop.f32.mrf.mxu0
        %v2591 = vadd.f32 0.0, %v2590
        %v2592 = vpop.f32.mrf.mxu0
        %v2593 = vadd.f32 0.0, %v2592
        %v2594 = vpop.f32.mrf.mxu0
        %v2595 = vadd.f32 0.0, %v2594
        %2596 = vmatprep.mubr.bf16.mxu0 0
        %2597 = vmatmul.mubr.bf16.gmra.mxu0 %v2492
        %v2598 = vpop.f32.mrf.mxu0
        %v2599 = vadd.f32 0.0, %v2598
        %v2600 = vpop.f32.mrf.mxu0
        %v2601 = vadd.f32 0.0, %v2600
        %v2602 = vpop.f32.mrf.mxu0
        %v2603 = vadd.f32 0.0, %v2602
        %v2604 = vpop.f32.mrf.mxu0
        %v2605 = vadd.f32 0.0, %v2604
        %2606 = vdwg.mxu0
        %v2607 = vadd.f32 %v2333, %v2529
        %v2608 = vadd.f32 %v2334, %v2531
        %v2609 = vadd.f32 %v2335, %v2533
        %v2610 = vadd.f32 %v2336, %v2535
        %v2611 = vadd.f32 %v2337, %v2539
        %v2612 = vadd.f32 %v2338, %v2541
        %v2613 = vadd.f32 %v2339, %v2543
        %v2614 = vadd.f32 %v2340, %v2545
        %v2615 = vadd.f32 %v2341, %v2549
        %v2616 = vadd.f32 %v2342, %v2551
        %v2617 = vadd.f32 %v2343, %v2553
        %v2618 = vadd.f32 %v2344, %v2555
        %v2619 = vadd.f32 %v2345, %v2559
        %v2620 = vadd.f32 %v2346, %v2561
        %v2621 = vadd.f32 %v2347, %v2563
        %v2622 = vadd.f32 %v2348, %v2565
        %v2623 = vadd.f32 %v2349, %v2569
        %v2624 = vadd.f32 %v2350, %v2571
        %v2625 = vadd.f32 %v2351, %v2573
        %v2626 = vadd.f32 %v2352, %v2575
        %v2627 = vadd.f32 %v2353, %v2579
        %v2628 = vadd.f32 %v2354, %v2581
        %v2629 = vadd.f32 %v2355, %v2583
        %v2630 = vadd.f32 %v2356, %v2585
        %v2631 = vadd.f32 %v2357, %v2589
        %v2632 = vadd.f32 %v2358, %v2591
        %v2633 = vadd.f32 %v2359, %v2593
        %v2634 = vadd.f32 %v2360, %v2595
        %v2635 = vadd.f32 %v2361, %v2599
        %v2636 = vadd.f32 %v2362, %v2601
        %v2637 = vadd.f32 %v2363, %v2603
        %v2638 = vadd.f32 %v2364, %v2605
        %vm2655 = vcmask 1046528
        %v2656 = vrot.slane %v2607, 1
        %v2657 = vrot.slane %v2609, 1
        %v2658 = vsel %vm2655, %v2656, %v2657
        %v2659 = vrot.slane %v2611, 1
        %v2660 = vrot.slane %v2613, 1
        %v2661 = vsel %vm2655, %v2659, %v2660
        %v2662 = vrot.slane %v2615, 1
        %v2663 = vrot.slane %v2617, 1
        %v2664 = vsel %vm2655, %v2662, %v2663
        %v2665 = vrot.slane %v2619, 1
        %v2666 = vrot.slane %v2621, 1
        %v2667 = vsel %vm2655, %v2665, %v2666
        %v2668 = vrot.slane %v2623, 1
        %v2669 = vrot.slane %v2625, 1
        %v2670 = vsel %vm2655, %v2668, %v2669
        %v2671 = vrot.slane %v2627, 1
        %v2672 = vrot.slane %v2629, 1
        %v2673 = vsel %vm2655, %v2671, %v2672
        %v2674 = vrot.slane %v2631, 1
        %v2675 = vrot.slane %v2633, 1
        %v2676 = vsel %vm2655, %v2674, %v2675
        %v2677 = vrot.slane %v2635, 1
        %v2678 = vrot.slane %v2637, 1
        %v2679 = vsel %vm2655, %v2677, %v2678
        %2680 = vrot.lane.b32.xlu0 %v2658, 64
        %v2681 = vpop.permute.xlu0 %2680
        %2682 = vrot.lane.b32.xlu0 %v2661, 64
        %v2683 = vpop.permute.xlu0 %2682
        %2684 = vrot.lane.b32.xlu0 %v2664, 64
        %v2685 = vpop.permute.xlu0 %2684
        %2686 = vrot.lane.b32.xlu0 %v2667, 64
        %v2687 = vpop.permute.xlu0 %2686
        %2688 = vrot.lane.b32.xlu0 %v2670, 64
        %v2689 = vpop.permute.xlu0 %2688
        %2690 = vrot.lane.b32.xlu0 %v2673, 64
        %v2691 = vpop.permute.xlu0 %2690
        %2692 = vrot.lane.b32.xlu0 %v2676, 64
        %v2693 = vpop.permute.xlu0 %2692
        %2694 = vrot.lane.b32.xlu0 %v2679, 64
        %v2695 = vpop.permute.xlu0 %2694
        %v2704 = vadd.f32 %v2607, %v2681
        %v2705 = vadd.f32 %v2611, %v2683
        %v2706 = vadd.f32 %v2615, %v2685
        %v2707 = vadd.f32 %v2619, %v2687
        %v2708 = vadd.f32 %v2623, %v2689
        %v2709 = vadd.f32 %v2627, %v2691
        %v2710 = vadd.f32 %v2631, %v2693
        %v2711 = vadd.f32 %v2635, %v2695
        %vm2728 = vcmask 1045504
        %v2729 = vrot.slane %v2608, 2
        %v2730 = vrot.slane %v2610, 2
        %v2731 = vsel %vm2728, %v2729, %v2730
        %v2732 = vrot.slane %v2612, 2
        %v2733 = vrot.slane %v2614, 2
        %v2734 = vsel %vm2728, %v2732, %v2733
        %v2735 = vrot.slane %v2616, 2
        %v2736 = vrot.slane %v2618, 2
        %v2737 = vsel %vm2728, %v2735, %v2736
        %v2738 = vrot.slane %v2620, 2
        %v2739 = vrot.slane %v2622, 2
        %v2740 = vsel %vm2728, %v2738, %v2739
        %v2741 = vrot.slane %v2624, 2
        %v2742 = vrot.slane %v2626, 2
        %v2743 = vsel %vm2728, %v2741, %v2742
        %v2744 = vrot.slane %v2628, 2
        %v2745 = vrot.slane %v2630, 2
        %v2746 = vsel %vm2728, %v2744, %v2745
        %v2747 = vrot.slane %v2632, 2
        %v2748 = vrot.slane %v2634, 2
        %v2749 = vsel %vm2728, %v2747, %v2748
        %v2750 = vrot.slane %v2636, 2
        %v2751 = vrot.slane %v2638, 2
        %v2752 = vsel %vm2728, %v2750, %v2751
        %v2761 = vadd.f32 %v2704, %v2731
        %v2762 = vadd.f32 %v2705, %v2734
        %v2763 = vadd.f32 %v2706, %v2737
        %v2764 = vadd.f32 %v2707, %v2740
        %v2765 = vadd.f32 %v2708, %v2743
        %v2766 = vadd.f32 %v2709, %v2746
        %v2767 = vadd.f32 %v2710, %v2749
        %v2768 = vadd.f32 %v2711, %v2752
        %v2769 = vmax.f32 %v2761, 0.0
        %v2770 = vmax.f32 %v2762, 0.0
        %v2771 = vmax.f32 %v2763, 0.0
        %v2772 = vmax.f32 %v2764, 0.0
        %v2773 = vmax.f32 %v2765, 0.0
        %v2774 = vmax.f32 %v2766, 0.0
        %v2775 = vmax.f32 %v2767, 0.0
        %v2776 = vmax.f32 %v2768, 0.0
        %2777 = vst.msk [vmem:[%s274] sm:$0xff] %vm422, %v2769
        %2778 = vst.msk [vmem:[%s274 + $0x8] sm:$0xff] %vm422, %v2770
        %2779 = vst.msk [vmem:[%s274 + $0x10] sm:$0xff] %vm422, %v2771
        %2780 = vst.msk [vmem:[%s274 + $0x18] sm:$0xff] %vm422, %v2772
        %2781 = vst.msk [vmem:[%s274 + $0x20] sm:$0xff] %vm422, %v2773
        %2782 = vst.msk [vmem:[%s274 + $0x28] sm:$0xff] %vm422, %v2774
        %2783 = vst.msk [vmem:[%s274 + $0x30] sm:$0xff] %vm422, %v2775
        %2784 = vst.msk [vmem:[%s274 + $0x38] sm:$0xff] %vm422, %v2776
        %s2785 = sand.u32 %s149, 1
        %s2786 = scalar_lea.sflag [#allocation3], %s2785
        %s2787 = sand.u32 %s149, 1
        %s2788 = smul.addr %s2787, 64
        %s2789 = scalar_lea.vmem [#allocation2], %s2788
        // Predicated region
        $region37: #{tpu_custom_call.1} parent=35 // pred_check
          %p2790 = pneg %p159
        $region38: #{tpu_custom_call.1} parent=35 // pred_check_branch
          %2792 = sbr.rel (%p2790) target = $region40
        $region39: #{tpu_custom_call.1} parent=35 // pred_region
          %s2794 = ssub.s32 1024, 1024
          %2795 = vsyncadd %s2786, %s2794
          %s2796 = smul.addr %s23, 8
          %s2797 = smul.addr %s22, 32
          %s2798 = sadd.s32 %s2796, %s2797
          %s2799 = smul.addr %s2798, 128
          %s2800 = scalar_lea.hbm %s4, %s2799
          %s2801 = sshll.u32 %s2789, 4
          %s2802 = int_to_ptr.vmem [resolvable:$true] %s2801
          %2807 = dma.vmem_to_hbm [thread:$0]  %s2802, 1024, %s2800, %s2786, 128, 128, 8
        $region40: #{tpu_custom_call.1} parent=35 // pred_fallthru
          _
      $region36: #{tpu_custom_call.1} parent=5 // pred_fallthru
        _
      %p2808 = scmp.le.s32.totalorder 2, %s13
      // Predicated region
      $region41: #{tpu_custom_call.1} parent=5 // pred_check
        %p2809 = pneg %p2808
      $region42: #{tpu_custom_call.1} parent=5 // pred_check_branch
        %2811 = sbr.rel (%p2809) target = $region44
      $region43: #{tpu_custom_call.1} parent=5 // pred_region
        %s2812 = ssub.s32 %s13, 2
        // Predicated region
        $region45: #{tpu_custom_call.1} parent=43 // pred_check
          %p2813 = pneg %p165
        $region46: #{tpu_custom_call.1} parent=43 // pred_check_branch
          %2815 = sbr.rel (%p2813) target = $region48
        $region47: #{tpu_custom_call.1} parent=43 // pred_region
          %s2816 = sand.u32 %s150, 1
          %s2817 = scalar_lea.sflag [#allocation3], %s2816
          %s2818 = sand.u32 %s150, 1
          %s2819 = smul.addr %s2818, 64
          %s2820 = scalar_lea.vmem [#allocation2], %s2819
          %2821 = dma.done %s2817, 1024
        $region48: #{tpu_custom_call.1} parent=43 // pred_fallthru
          _
      $region44: #{tpu_custom_call.1} parent=5 // pred_fallthru
        _
    $region6: #{tpu_custom_call.1} parent=1 // loop_footer
      %s17 = sadd.s32 1, %s13
    $region7: #{tpu_custom_call.1} parent=1 // loop_footer_branch
      %12 = sbr.rel target = $region3
    $region8: #{tpu_custom_call.1} parent=1 // loop_exit
      _
    %2822 = vsyncpa [#allocation3], 1
    %s2823 = scalar_lea.sflag [#allocation3], 1
    %2824 = vsyncpa %s2823, 1

</llo_original>
